<compile_context>
chip_gen: v6e
topology: v6e:2x2x1
jax: 0.10.0
libtpu: 0.0.40
codegen_flags: <defaults>
</compile_context>

<pallas_src>
import math

import numpy as np

import jax
import jax.numpy as jnp
from jax import lax
from jax.experimental import pallas as pl
from jax.experimental.pallas import tpu as pltpu


def _upsample_kernel(x_ref, ew_ref, eh_ref, o_ref):
    """One grid step: nearest-upsample a row-tile of B planes.

    x_ref : (B, TH,  W)   input row-tile of B planes
    ew_ref: (W,  Wo)      one-hot column expansion (Ew[w, wo] = 1 iff wi(wo)==w)
    eh_ref: (THo, TH)     one-hot row expansion for this row-tile
    o_ref : (B, THo, Wo)  output row-tile
    """
    B = x_ref.shape[0]
    x = x_ref[...].astype(jnp.float32)                        # (B, TH, W)
    ew = jnp.broadcast_to(ew_ref[...], (B,) + ew_ref.shape)   # (B, W, Wo)
    eh = jnp.broadcast_to(eh_ref[...], (B,) + eh_ref.shape)   # (B, THo, TH)

    # Width expansion: one batched dot_general (B x [TH,W] @ [W,Wo]).
    y = jnp.einsum("bhw,bwo->bho", x, ew,
                   precision=lax.Precision.HIGHEST,
                   preferred_element_type=jnp.float32)        # (B, TH, Wo)
    # Height expansion: one batched dot_general (B x [THo,TH] @ [TH,Wo]).
    out = jnp.einsum("boh,bhw->bow", eh, y,
                     precision=lax.Precision.HIGHEST,
                     preferred_element_type=jnp.float32)      # (B, THo, Wo)
    o_ref[...] = out.astype(o_ref.dtype)


def _round_up(a, m):
    return -(-a // m) * m


def _sublane_multiple(itemsize):
    # f32 -> 8 sublanes, bf16 -> 16, int8/fp8 -> 32
    return max(8, 32 // max(int(itemsize), 1))


def _budgets():
    """(tile_budget_bytes, vmem_limit_bytes), generation aware."""
    kind = ""
    try:
        kind = jax.devices()[0].device_kind.lower()
    except Exception:
        pass
    if ("v4" in kind) or ("v5" in kind) or ("v6" in kind):
        return 16 << 20, 64 << 20          # 128 MiB VMEM parts
    return 8 << 20, 32 << 20               # v7x (64 MiB physical) / unknown


def _tile_bytes(th, tho, w, wo, itemsize, sub):
    """VMEM footprint of one plane's row-tile, (8,128)-padding aware."""
    in_b = _round_up(th, sub) * _round_up(w, 128) * itemsize
    out_b = _round_up(tho, sub) * _round_up(wo, 128) * itemsize
    # f32 intermediates (width-expanded tile + f32 result before the cast)
    tmp_b = (_round_up(th, 8) + _round_up(tho, 8)) * _round_up(wo, 128) * 4
    return 2 * (in_b + out_b) + tmp_b       # 2x: Pallas double-buffers in/out


def _pick_plane_batch(nc, row_tiles, per_plane_tile_bytes, tile_budget,
                      min_grid=4):
    """Largest plane-batch B that fits the VMEM budget while keeping at least
    `min_grid` grid steps (megacore + pipelining); prefers divisors of nc so
    no padding copy is needed."""
    b_cap = max(1, min(nc, tile_budget // max(per_plane_tile_bytes, 1)))
    min_steps = min(min_grid, nc * row_tiles)
    feasible = [b for b in range(1, b_cap + 1)
                if (-(-nc // b)) * row_tiles >= min_steps]
    if not feasible:
        feasible = [1]
    best_any = max(feasible)
    divisors = [b for b in feasible if nc % b == 0]
    best_div = max(divisors) if divisors else 0
    # Prefer an exact divisor unless it would halve the batch size.
    return best_div if best_div * 2 >= best_any else best_any


def upsample_nearest(x, scale_factor):
    """Equivalent of F.interpolate(x, scale_factor=scale_factor, mode='nearest').

    x: (N, C, H, W) float array.
    """
    N, C, H, W = x.shape
    if isinstance(scale_factor, (tuple, list)):
        sh, sw = float(scale_factor[0]), float(scale_factor[1])
    else:
        sh = sw = float(scale_factor)
    Ho = int(math.floor(H * sh))
    Wo = int(math.floor(W * sw))
    nc = N * C

    itemsize = jnp.dtype(x.dtype).itemsize
    sub = _sublane_multiple(itemsize)
    tile_budget, vmem_limit = _budgets()

    # ---- optional output-row tiling (keeps huge planes inside v7x VMEM) ----
    TH, THo, T = H, Ho, 1
    if _tile_bytes(H, Ho, W, Wo, itemsize, sub) > tile_budget and Ho % H == 0:
        s_h = Ho // H
        cands = [d for d in range(1, H) if H % d == 0 and d % sub == 0]
        fitting = [d for d in cands
                   if _tile_bytes(d, d * s_h, W, Wo, itemsize, sub) <= tile_budget]
        if fitting:
            TH = max(fitting)
        elif cands:
            TH = min(cands)
        if TH != H:
            THo, T = TH * s_h, H // TH

    # ---- plane batch: padding-aware VMEM estimate, >=4 grid steps ----------
    per_tile = _tile_bytes(TH, THo, W, Wo, itemsize, sub)
    B = _pick_plane_batch(nc, T, per_tile, tile_budget)
    G = -(-nc // B)
    nc_pad = G * B

    xf = x.reshape(nc, H, W)
    if nc_pad != nc:
        xf = jnp.concatenate(
            [xf, jnp.zeros((nc_pad - nc, H, W), xf.dtype)], axis=0)

    # ---- one-hot expansion operators (host side, 64-bit index math) --------
    # PyTorch 'nearest' rule: src = floor(dst * in / out).
    wi = (np.arange(Wo, dtype=np.int64) * W) // Wo
    ew_np = (np.arange(W, dtype=np.int64)[:, None] == wi[None, :]).astype(np.float32)
    hi = (np.arange(THo, dtype=np.int64) * TH) // THo   # shift-invariant per row-tile
    eh_np = (hi[:, None] == np.arange(TH, dtype=np.int64)[None, :]).astype(np.float32)
    ew = jnp.asarray(ew_np)                              # (W,  Wo)
    eh = jnp.asarray(eh_np)                              # (THo, TH)

    flops = 2 * nc * (H * W * Wo + Ho * H * Wo)
    bytes_accessed = int(nc * (H * W + Ho * Wo) * itemsize)

    out = pl.pallas_call(
        _upsample_kernel,
        out_shape=jax.ShapeDtypeStruct((nc_pad, Ho, Wo), x.dtype),
        grid_spec=pltpu.PrefetchScalarGridSpec(
            num_scalar_prefetch=0,
            grid=(G, T),
            in_specs=[
                pl.BlockSpec((B, TH, W), lambda g, t: (g, t, 0)),
                pl.BlockSpec((W, Wo), lambda g, t: (0, 0)),
                pl.BlockSpec((THo, TH), lambda g, t: (0, 0)),
            ],
            out_specs=pl.BlockSpec((B, THo, Wo), lambda g, t: (g, t, 0)),
        ),
        compiler_params=pltpu.CompilerParams(
            dimension_semantics=("parallel", "parallel"),
            vmem_limit_bytes=vmem_limit,
        ),
        cost_estimate=pl.CostEstimate(
            flops=flops, transcendentals=0, bytes_accessed=bytes_accessed),
    )(xf, ew, eh)

    if nc_pad != nc:
        out = out[:nc]
    return out.reshape(N, C, Ho, Wo)


class Upsample:
    """JAX/Pallas counterpart of the PyTorch Upsample module (no parameters)."""

    def __init__(self, scale_factor, mode="nearest"):
        assert mode == "nearest", "only 'nearest' mode implemented"
        self.scale_factor = scale_factor
        self.mode = mode

    def __call__(self, x):
        return upsample_nearest(x, self.scale_factor)


if __name__ == "__main__":
    key = jax.random.PRNGKey(0)
    N, C, H, W = 2, 4, 16, 16
    scale = 2
    x = jax.random.normal(key, (N, C, H, W), dtype=jnp.float32)

    model = Upsample(scale_factor=scale, mode="nearest")
    y = jax.block_until_ready(model(x))

    # Reference nearest upsample in plain JAX (same index rule as PyTorch).
    Ho, Wo = H * scale, W * scale
    hi = (jnp.arange(Ho) * H) // Ho
    wi = (jnp.arange(Wo) * W) // Wo
    ref = x[:, :, hi, :][:, :, :, wi]

    assert y.shape == (N, C, Ho, Wo), y.shape
    assert y.dtype == x.dtype, y.dtype
    assert jnp.allclose(y, ref, rtol=1e-6, atol=1e-6), "mismatch vs reference"
    print("KERNEL_OK")
</pallas_src>

<mosaic_0001>
module attributes {stable_mosaic.version = 11 : i64} {
  func.func @_upsample_kernel(%arg0: i32, %arg1: i32, %arg2: memref<2x16x16xf32, #tpu.memory_space<vmem>>, %arg3: memref<16x32xf32, #tpu.memory_space<vmem>>, %arg4: memref<32x16xf32, #tpu.memory_space<vmem>>, %arg5: memref<2x32x32xf32, #tpu.memory_space<vmem>>) attributes {dimension_semantics = [#tpu.dimension_semantics<parallel>, #tpu.dimension_semantics<parallel>], iteration_bounds = array<i64: 4, 1>, scalar_prefetch = 0 : i64, scratch_operands = 0 : i64, tpu.core_type = #tpu.core_type<tc>, window_params = [{transform_indices = @transform_0, window_bounds = array<i64: 2, 16, 16>}, {pipeline_mode = #tpu.pipeline_mode<synchronous>, transform_indices = @transform_1, window_bounds = array<i64: 16, 32>}, {pipeline_mode = #tpu.pipeline_mode<synchronous>, transform_indices = @transform_2, window_bounds = array<i64: 32, 16>}, {transform_indices = @transform_3, window_bounds = array<i64: 2, 32, 32>}]} {
    %c0 = arith.constant 0 : index
    %c0_0 = arith.constant 0 : index
    %c0_1 = arith.constant 0 : index
    %0 = vector.load %arg2[%c0, %c0_0, %c0_1] : memref<2x16x16xf32, #tpu.memory_space<vmem>>, vector<2x16x16xf32>
    %c0_2 = arith.constant 0 : index
    %c0_3 = arith.constant 0 : index
    %1 = vector.load %arg3[%c0_2, %c0_3] : memref<16x32xf32, #tpu.memory_space<vmem>>, vector<16x32xf32>
    %2 = vector.shape_cast %1 : vector<16x32xf32> to vector<1x16x32xf32>
    %3 = vector.broadcast %2 : vector<1x16x32xf32> to vector<2x16x32xf32>
    %c0_4 = arith.constant 0 : index
    %c0_5 = arith.constant 0 : index
    %4 = vector.load %arg4[%c0_4, %c0_5] : memref<32x16xf32, #tpu.memory_space<vmem>>, vector<32x16xf32>
    %5 = vector.shape_cast %4 : vector<32x16xf32> to vector<1x32x16xf32>
    %6 = vector.broadcast %5 : vector<1x32x16xf32> to vector<2x32x16xf32>
    "tpu.trace_start"() <{level = 10 : i32, message = "bhw,bwo->bho"}> : () -> ()
    %cst = arith.constant dense<0.000000e+00> : vector<2x16x32xf32>
    %7 = tpu.matmul %0, %3, %cst {dimension_numbers = #tpu.dot_dimension_numbers<[2], [1], [1], [2], [0, 0, 0, 1, 1, 2], [0], [0]>, precision = #tpu.contract_precision<fp32>} : vector<2x16x16xf32>, vector<2x16x32xf32>, vector<2x16x32xf32> -> vector<2x16x32xf32>
    "tpu.trace_stop"() : () -> ()
    "tpu.trace_start"() <{level = 10 : i32, message = "boh,bhw->bow"}> : () -> ()
    %cst_6 = arith.constant dense<0.000000e+00> : vector<2x32x32xf32>
    %8 = tpu.matmul %6, %7, %cst_6 {dimension_numbers = #tpu.dot_dimension_numbers<[2], [1], [1], [2], [0, 0, 0, 1, 1, 2], [0], [0]>, precision = #tpu.contract_precision<fp32>} : vector<2x32x16xf32>, vector<2x16x32xf32>, vector<2x32x32xf32> -> vector<2x32x32xf32>
    "tpu.trace_stop"() : () -> ()
    %c0_7 = arith.constant 0 : index
    %c0_8 = arith.constant 0 : index
    %c0_9 = arith.constant 0 : index
    %9 = vector.load %arg5[%c0_7, %c0_8, %c0_9] : memref<2x32x32xf32, #tpu.memory_space<vmem>>, vector<2x32x32xf32>
    tpu.vector_store %arg5[%c0_7, %c0_8, %c0_9], %8 {strides = array<i32>} : memref<2x32x32xf32, #tpu.memory_space<vmem>>, vector<2x32x32xf32>,
    return
  }
  func.func @transform_0(%arg0: i32, %arg1: i32) -> (i32, i32, i32) {
    %c0_i32 = arith.constant 0 : i32
    %c0_i32_0 = arith.constant 0 : i32
    return %arg0, %arg1, %c0_i32 : i32, i32, i32
  }
  func.func @transform_1(%arg0: i32, %arg1: i32) -> (i32, i32) {
    %c0_i32 = arith.constant 0 : i32
    %c0_i32_0 = arith.constant 0 : i32
    %c0_i32_1 = arith.constant 0 : i32
    return %c0_i32, %c0_i32_0 : i32, i32
  }
  func.func @transform_2(%arg0: i32, %arg1: i32) -> (i32, i32) {
    %c0_i32 = arith.constant 0 : i32
    %c0_i32_0 = arith.constant 0 : i32
    %c0_i32_1 = arith.constant 0 : i32
    return %c0_i32, %c0_i32_0 : i32, i32
  }
  func.func @transform_3(%arg0: i32, %arg1: i32) -> (i32, i32, i32) {
    %c0_i32 = arith.constant 0 : i32
    %c0_i32_0 = arith.constant 0 : i32
    return %arg0, %arg1, %c0_i32 : i32, i32, i32
  }
}

</mosaic_0001>

<llo_original>
// kernel: tpu_custom_call.1
$region0: #{tpu_custom_call.1}
  #allocation0 [shape = 'u32[]', space=smem, size = 0x4, offset = 0x4, fixed_abs, tag = 'smem constant byte address 0x4 - core index']
  #allocation1 [shape = 'u32[144,128]{1,0:T(1,128)}', space=vmem, size = 0x12000, scoped, tag = 'internal scratch']
  %s0 = inlined_call_operand.hbm [shape: f32[8,16,16], index: 0, kind: input, shape index: {}]
  %s1 = inlined_call_operand.vmem [shape: f32[16,32], index: 1, kind: input, shape index: {}]
  %s2 = inlined_call_operand.vmem [shape: f32[32,16], index: 2, kind: input, shape index: {}]
  %s3 = inlined_call_operand.hbm [shape: f32[8,32,32], index: 3, kind: output, shape index: {}]
  %s4 = sld [smem:[#allocation0]]
  $region49: #{tpu_custom_call.1} parent=0
    _
  %s6 = ssub.s32 1, %s4
  %s7 = scalar_select 0, %s6, %s4
  $region1: #{tpu_custom_call.1} parent=0
    #allocation2 [shape = 'u8[32768]{0}', space=vmem, size = 0x8000, scoped, tag = 'input window, operand 0']
    #allocation3 [shape = 's32[2]{0}', space=sflag, size = 0x8, scoped, tag = 'scoped memory for tpu_custom_call.1']
    #allocation4 [shape = 's32[2]{0}', space=sflag, size = 0x8, scoped, tag = 'scoped memory for tpu_custom_call.1']
    #allocation5 [shape = 'u8[65536]{0}', space=vmem, size = 0x10000, scoped, tag = 'output window, operand 0']
    %8 = vsyncpa [#allocation3], 0
    %s9 = scalar_lea.sflag [#allocation3], 1
    %10 = vsyncpa %s9, 0
    %11 = vsyncpa [#allocation4], 0
    %s12 = scalar_lea.sflag [#allocation4], 1
    %13 = vsyncpa %s12, 0
    loop: start=0, step=1, limit=6
    $region2: #{tpu_custom_call.1} parent=1 // loop_pre_header
      _
    $region3: #{tpu_custom_call.1} parent=1 // loop_header
      %s15 = sphi 0, %s19
      %p16 = scmp.ge.s32.totalorder %s15, 6
      %s22 = sphi 0, %s34
      %s23 = sphi 0, %s30
      %s24 = sphi 0, %s22
      %s25 = sphi 0, %s23
      %s26 = sphi 0, %s24
      %s27 = sphi 0, %s25
      %s39 = sphi 0, %s41
      %s42 = sphi 0, %s39
      %s43 = sphi 0, %s42
      %s59 = sphi 0, %s43
      %s63 = sphi 0, %s63
      %s65 = sphi 0, %s63
      %s66 = sphi 0, %s65
      %s80 = sphi 0, %s66
      %s84 = sphi 0, %s84
      %s86 = sphi 0, %s84
      %s87 = sphi 0, %s86
      %s101 = sphi 0, %s87
      %s109 = sphi 0, %s111
      %s112 = sphi 0, %s109
      %s113 = sphi 0, %s112
      %s129 = sphi 0, %s113
    $region4: #{tpu_custom_call.1} parent=1 // loop_header_branch
      %18 = sbr.rel (%p16) target = $region8
    $region5: #{tpu_custom_call.1} parent=1 // loop_body
      %s20 = ssub.s32 %s15, 1
      %s21 = ssub.s32 %s15, 2
      %s28 = sadd.s32 1, %s23
      %p29 = scmp.ge.s32.totalorder %s28, 1
      %s30 = scalar_select %p29, 0, %s28
      %s31 = sadd.s32 1, %s22
      %s32 = scalar_select %p29, %s31, %s22
      %p33 = scmp.ge.s32.totalorder %s32, 4
      %s34 = scalar_select %p33, 0, %s32
      %s35 = ssub.s32 %s22, %s34
      %s36 = ssub.s32 %s23, %s30
      %s37 = sor.u32 %s35, %s36
      %p38 = scmp.eq.s32.totalorder %s37, 0
      %s40 = sadd.s32 %s39, 1
      %s41 = scalar_select %p38, %s39, %s40
      %p44 = pneg %p38
      %p45 = scmp.eq.s32.totalorder %s15, 3
      %p46 = por %p44, %p45
      %p47 = scmp.ne.s32.totalorder %s39, %s42
      %p48 = scmp.eq.s32.totalorder %s15, 0
      %p49 = por %p47, %p48
      %p50 = scmp.ne.s32.totalorder %s39, %s42
      %p51 = scmp.eq.s32.totalorder %s20, 3
      %p52 = por %p50, %p51
      %p53 = scmp.ne.s32.totalorder %s42, %s43
      %p54 = scmp.eq.s32.totalorder %s20, 0
      %p55 = por %p53, %p54
      %p56 = scmp.ne.s32.totalorder %s42, %s43
      %p57 = scmp.eq.s32.totalorder %s21, 3
      %p58 = por %p56, %p57
      %p60 = scmp.ne.s32.totalorder %s43, %s59
      %p61 = scmp.eq.s32.totalorder %s21, 0
      %p62 = por %p60, %p61
      %s64 = sadd.s32 %s63, 1
      %p67 = scmp.eq.s32.totalorder %s15, 3
      %p68 = scmp.ne.s32.totalorder %s63, %s65
      %p69 = scmp.eq.s32.totalorder %s15, 0
      %p70 = por %p68, %p69
      %p71 = scmp.ne.s32.totalorder %s63, %s65
      %p72 = scmp.eq.s32.totalorder %s20, 3
      %p73 = por %p71, %p72
      %p74 = scmp.ne.s32.totalorder %s65, %s66
      %p75 = scmp.eq.s32.totalorder %s20, 0
      %p76 = por %p74, %p75
      %p77 = scmp.ne.s32.totalorder %s65, %s66
      %p78 = scmp.eq.s32.totalorder %s21, 3
      %p79 = por %p77, %p78
      %p81 = scmp.ne.s32.totalorder %s66, %s80
      %p82 = scmp.eq.s32.totalorder %s21, 0
      %p83 = por %p81, %p82
      %s85 = sadd.s32 %s84, 1
      %p88 = scmp.eq.s32.totalorder %s15, 3
      %p89 = scmp.ne.s32.totalorder %s84, %s86
      %p90 = scmp.eq.s32.totalorder %s15, 0
      %p91 = por %p89, %p90
      %p92 = scmp.ne.s32.totalorder %s84, %s86
      %p93 = scmp.eq.s32.totalorder %s20, 3
      %p94 = por %p92, %p93
      %p95 = scmp.ne.s32.totalorder %s86, %s87
      %p96 = scmp.eq.s32.totalorder %s20, 0
      %p97 = por %p95, %p96
      %p98 = scmp.ne.s32.totalorder %s86, %s87
      %p99 = scmp.eq.s32.totalorder %s21, 3
      %p100 = por %p98, %p99
      %p102 = scmp.ne.s32.totalorder %s87, %s101
      %p103 = scmp.eq.s32.totalorder %s21, 0
      %p104 = por %p102, %p103
      %s105 = ssub.s32 %s22, %s34
      %s106 = ssub.s32 %s23, %s30
      %s107 = sor.u32 %s105, %s106
      %p108 = scmp.eq.s32.totalorder %s107, 0
      %s110 = sadd.s32 %s109, 1
      %s111 = scalar_select %p108, %s109, %s110
      %p114 = pneg %p108
      %p115 = scmp.eq.s32.totalorder %s15, 3
      %p116 = por %p114, %p115
      %p117 = scmp.ne.s32.totalorder %s109, %s112
      %p118 = scmp.eq.s32.totalorder %s15, 0
      %p119 = por %p117, %p118
      %p120 = scmp.ne.s32.totalorder %s109, %s112
      %p121 = scmp.eq.s32.totalorder %s20, 3
      %p122 = por %p120, %p121
      %p123 = scmp.ne.s32.totalorder %s112, %s113
      %p124 = scmp.eq.s32.totalorder %s20, 0
      %p125 = por %p123, %p124
      %p126 = scmp.ne.s32.totalorder %s112, %s113
      %p127 = scmp.eq.s32.totalorder %s21, 3
      %p128 = por %p126, %p127
      %p130 = scmp.ne.s32.totalorder %s113, %s129
      %p131 = scmp.eq.s32.totalorder %s21, 0
      %p132 = por %p130, %p131
      %p133 = scmp.le.s32.totalorder 1, %s15
      %p134 = scmp.lt.s32.totalorder %s15, 5
      %p135 = pnand %p133, %p134
      %p136 = pneg %p135
      // Predicated region
      $region9: #{tpu_custom_call.1} parent=5 // pred_check
        _
      $region10: #{tpu_custom_call.1} parent=5 // pred_check_branch
        %138 = sbr.rel (%p135) target = $region12
      $region11: #{tpu_custom_call.1} parent=5 // pred_region
        %s139 = ssub.s32 %s15, 1
        // Predicated region
        $region13: #{tpu_custom_call.1} parent=11 // pred_check
          %p140 = pneg %p76
        $region14: #{tpu_custom_call.1} parent=11 // pred_check_branch
          %142 = sbr.rel (%p140) target = $region16
        $region15: #{tpu_custom_call.1} parent=11 // pred_region
          _
        $region16: #{tpu_custom_call.1} parent=11 // pred_fallthru
          _
        // Predicated region
        $region17: #{tpu_custom_call.1} parent=11 // pred_check
          %p143 = pneg %p97
        $region18: #{tpu_custom_call.1} parent=11 // pred_check_branch
          %145 = sbr.rel (%p143) target = $region20
        $region19: #{tpu_custom_call.1} parent=11 // pred_region
          _
        $region20: #{tpu_custom_call.1} parent=11 // pred_fallthru
          _
      $region12: #{tpu_custom_call.1} parent=5 // pred_fallthru
        _
      %p146 = scmp.lt.s32.totalorder %s15, 4
      // Predicated region
      $region21: #{tpu_custom_call.1} parent=5 // pred_check
        %p147 = pneg %p146
      $region22: #{tpu_custom_call.1} parent=5 // pred_check_branch
        %149 = sbr.rel (%p147) target = $region24
      $region23: #{tpu_custom_call.1} parent=5 // pred_region
        // Predicated region
        $region25: #{tpu_custom_call.1} parent=23 // pred_check
          %p150 = pneg %p49
        $region26: #{tpu_custom_call.1} parent=23 // pred_check_branch
          %152 = sbr.rel (%p150) target = $region28
        $region27: #{tpu_custom_call.1} parent=23 // pred_region
          %s153 = sand.u32 %s39, 1
          %s154 = scalar_lea.sflag [#allocation3], %s153
          %s155 = sand.u32 %s39, 1
          %s156 = smul.addr %s155, 32
          %s157 = scalar_lea.vmem [#allocation2], %s156
          %s158 = smul.u32 2, %s22
          %s159 = smul.u32 2, %s23
          %s161 = ssub.s32 512, 512
          %162 = vsyncadd %s154, %s161
          %s163 = smul.addr %s158, 2
          %s164 = sadd.s32 %s159, %s163
          %s165 = smul.addr %s164, 128
          %s166 = scalar_lea.hbm %s0, %s165
          %s167 = sshll.u32 %s157, 4
          %s168 = int_to_ptr.vmem [resolvable:$true] %s167
          %173 = dma.hbm_to_vmem [thread:$0]  %s166, 512, %s168, %s154, 128, 128, 8
        $region28: #{tpu_custom_call.1} parent=23 // pred_fallthru
          _
      $region24: #{tpu_custom_call.1} parent=5 // pred_fallthru
        _
      %p174 = scmp.le.s32.totalorder 1, %s15
      %p175 = scmp.lt.s32.totalorder %s15, 5
      %p176 = pnand %p174, %p175
      %p177 = pneg %p176
      // Predicated region
      $region29: #{tpu_custom_call.1} parent=5 // pred_check
        _
      $region30: #{tpu_custom_call.1} parent=5 // pred_check_branch
        %179 = sbr.rel (%p176) target = $region32
      $region31: #{tpu_custom_call.1} parent=5 // pred_region
        %s180 = ssub.s32 %s15, 1
        %s181 = sand.u32 %s42, 1
        %s182 = scalar_lea.sflag [#allocation3], %s181
        %s183 = sand.u32 %s42, 1
        %s184 = smul.addr %s183, 32
        %s185 = scalar_lea.vmem [#allocation2], %s184
        // Predicated region
        $region33: #{tpu_custom_call.1} parent=31 // pred_check
          %p186 = pneg %p55
        $region34: #{tpu_custom_call.1} parent=31 // pred_check_branch
          %188 = sbr.rel (%p186) target = $region36
        $region35: #{tpu_custom_call.1} parent=31 // pred_region
          %189 = dma.done %s182, 512
        $region36: #{tpu_custom_call.1} parent=31 // pred_fallthru
          _
        %s190 = sand.u32 %s42, 1
        %s191 = scalar_lea.sflag [#allocation3], %s190
        %s192 = sand.u32 %s42, 1
        %s193 = smul.addr %s192, 32
        %s194 = scalar_lea.vmem [#allocation2], %s193
        %p195 = pneg %p55
        %p196 = pneg %p52
        %p197 = pneg %p76
        %p198 = pneg %p73
        %p199 = pneg %p97
        %p200 = pneg %p94
        %p201 = pneg %p125
        %p202 = pneg %p122
        %s203 = sand.u32 %s112, 1
        %s204 = scalar_lea.sflag [#allocation4], %s203
        %s205 = sand.u32 %s112, 1
        %s206 = smul.addr %s205, 64
        %s207 = scalar_lea.vmem [#allocation5], %s206
        %s208 = smul.u32 2, %s24
        %s209 = smul.u32 2, %s25
        %s210 = smul.u32 2, %s24
        %s211 = smul.u32 4, %s25
        %v212 = vld [vmem:[%s185] sm:$0xff]
        %v213 = vld [vmem:[%s185 + $0x8] sm:$0xff]
        %v214 = vld [vmem:[%s185 + $0x10] sm:$0xff]
        %v215 = vld [vmem:[%s185 + $0x18] sm:$0xff]
        %v216 = vld [vmem:[%s1] sm:$0xff]
        %v217 = vld [vmem:[%s1 + $0x8] sm:$0xff]
        %v218 = vld [vmem:[%s2] sm:$0xff]
        %v219 = vld [vmem:[%s2 + $0x8] sm:$0xff]
        %v220 = vld [vmem:[%s2 + $0x10] sm:$0xff]
        %v221 = vld [vmem:[%s2 + $0x18] sm:$0xff]
        %vm222 = vcmask 130048
        %v224 = vsel %vm222, %v212, 0
        %v227 = vsel %vm222, %v213, 0
        %229 = vmatprep.subr.mxu0 0.0
        %230 = vmatpush1.msra.mxu0 0.0
        %231 = vmatprep.subr.mxu0 0.0
        %232 = vmatpush1.msra.mxu0 0.0
        %233 = vmatprep.subr.mxu0 0.0
        %234 = vmatpush1.msra.mxu0 0.0
        %235 = vmatprep.subr.mxu0 0.0
        %236 = vmatpush1.msra.mxu0 0.0
        %237 = vmatprep.subr.mxu0 0.0
        %238 = vmatpush1.msra.mxu0 0.0
        %239 = vmatprep.subr.mxu0 0.0
        %240 = vmatpush1.msra.mxu0 0.0
        %241 = vmatprep.subr.mxu0 0.0
        %242 = vmatpush1.msra.mxu0 0.0
        %243 = vmatprep.subr.mxu0 0.0
        %244 = vmatpush1.msra.mxu0 0.0
        %245 = vmatprep.subr.mxu0 0.0
        %246 = vmatpush1.msra.mxu0 0.0
        %247 = vmatprep.subr.mxu0 0.0
        %248 = vmatpush1.msra.mxu0 0.0
        %249 = vmatprep.subr.mxu0 0.0
        %250 = vmatpush1.msra.mxu0 0.0
        %251 = vmatprep.subr.mxu0 0.0
        %252 = vmatpush1.msra.mxu0 0.0
        %253 = vmatprep.subr.mxu0 0.0
        %254 = vmatpush1.msra.mxu0 0.0
        %255 = vmatprep.subr.mxu0 0.0
        %256 = vmatpush1.msra.mxu0 0.0
        %257 = vmatprep.subr.mxu0 0.0
        %v258 = vand.u32 %v217, 4294901760
        %259 = vmatpush1.msra.mxu0 %v258
        %260 = vmatprep.subr.mxu0 0.0
        %v261 = vand.u32 %v216, 4294901760
        %262 = vmatpush1.msra.mxu0 %v261
        %263 = vmatprep.subr.mxu0 0.0
        %264 = vmatpush2.msra.mxu0 0.0
        %265 = vmatprep.subr.mxu0 0.0
        %266 = vmatpush2.msra.mxu0 0.0
        %267 = vmatprep.subr.mxu0 0.0
        %268 = vmatpush2.msra.mxu0 0.0
        %269 = vmatprep.subr.mxu0 0.0
        %270 = vmatpush2.msra.mxu0 0.0
        %271 = vmatprep.subr.mxu0 0.0
        %272 = vmatpush2.msra.mxu0 0.0
        %273 = vmatprep.subr.mxu0 0.0
        %274 = vmatpush2.msra.mxu0 0.0
        %275 = vmatprep.subr.mxu0 0.0
        %276 = vmatpush2.msra.mxu0 0.0
        %277 = vmatprep.subr.mxu0 0.0
        %278 = vmatpush2.msra.mxu0 0.0
        %279 = vmatprep.subr.mxu0 0.0
        %280 = vmatpush2.msra.mxu0 0.0
        %281 = vmatprep.subr.mxu0 0.0
        %282 = vmatpush2.msra.mxu0 0.0
        %283 = vmatprep.subr.mxu0 0.0
        %284 = vmatpush2.msra.mxu0 0.0
        %285 = vmatprep.subr.mxu0 0.0
        %286 = vmatpush2.msra.mxu0 0.0
        %287 = vmatprep.subr.mxu0 0.0
        %288 = vmatpush2.msra.mxu0 0.0
        %289 = vmatprep.subr.mxu0 0.0
        %290 = vmatpush2.msra.mxu0 0.0
        %291 = vmatprep.subr.mxu0 0.0
        %292 = vmatpush2.msra.mxu0 0.0
        %293 = vmatprep.subr.mxu0 0.0
        %294 = vmatpush2.msra.mxu0 0.0
        %295 = vmatprep.mubr.f32.mxu0 0.0
        %v296 = vand.u32 %v224, 4294901760
        %v297 = vsub.f32 %v224, %v296
        %v298 = vand.u32 %v297, 4294901760
        %v299 = vsub.f32 %v297, %v298
        %v300 = vand.u32 %v299, 4294901760
        %301 = vmatmul.mubr.f32.gmra.mxu0 %v300
        %v302 = vpop.f32.mrf.mxu0
        %v303 = vadd.f32 0.0, %v302
        %v304 = vpop.f32.mrf.mxu0
        %305 = vmatprep.mubr.f32.mxu0 0.0
        %v306 = vand.u32 %v227, 4294901760
        %v307 = vsub.f32 %v227, %v306
        %v308 = vand.u32 %v307, 4294901760
        %v309 = vsub.f32 %v307, %v308
        %v310 = vand.u32 %v309, 4294901760
        %311 = vmatmul.mubr.f32.gmra.mxu0 %v310
        %v312 = vpop.f32.mrf.mxu0
        %v313 = vadd.f32 0.0, %v312
        %v314 = vpop.f32.mrf.mxu0
        %315 = vdwg.mxu0
        %316 = vmatprep.subr.mxu0 0.0
        %317 = vmatpush1.msra.mxu0 0.0
        %318 = vmatprep.subr.mxu0 0.0
        %319 = vmatpush1.msra.mxu0 0.0
        %320 = vmatprep.subr.mxu0 0.0
        %321 = vmatpush1.msra.mxu0 0.0
        %322 = vmatprep.subr.mxu0 0.0
        %323 = vmatpush1.msra.mxu0 0.0
        %324 = vmatprep.subr.mxu0 0.0
        %325 = vmatpush1.msra.mxu0 0.0
        %326 = vmatprep.subr.mxu0 0.0
        %327 = vmatpush1.msra.mxu0 0.0
        %328 = vmatprep.subr.mxu0 0.0
        %329 = vmatpush1.msra.mxu0 0.0
        %330 = vmatprep.subr.mxu0 0.0
        %331 = vmatpush1.msra.mxu0 0.0
        %332 = vmatprep.subr.mxu0 0.0
        %333 = vmatpush1.msra.mxu0 0.0
        %334 = vmatprep.subr.mxu0 0.0
        %335 = vmatpush1.msra.mxu0 0.0
        %336 = vmatprep.subr.mxu0 0.0
        %337 = vmatpush1.msra.mxu0 0.0
        %338 = vmatprep.subr.mxu0 0.0
        %339 = vmatpush1.msra.mxu0 0.0
        %340 = vmatprep.subr.mxu0 0.0
        %341 = vmatpush1.msra.mxu0 0.0
        %342 = vmatprep.subr.mxu0 0.0
        %343 = vmatpush1.msra.mxu0 0.0
        %344 = vmatprep.subr.mxu0 0.0
        %v345 = vand.u32 %v217, 4294901760
        %v346 = vsub.f32 %v217, %v345
        %v347 = vand.u32 %v346, 4294901760
        %v348 = vsub.f32 %v346, %v347
        %v349 = vand.u32 %v348, 4294901760
        %350 = vmatpush1.msra.mxu0 %v349
        %351 = vmatprep.subr.mxu0 0.0
        %v352 = vand.u32 %v216, 4294901760
        %v353 = vsub.f32 %v216, %v352
        %v354 = vand.u32 %v353, 4294901760
        %v355 = vsub.f32 %v353, %v354
        %v356 = vand.u32 %v355, 4294901760
        %357 = vmatpush1.msra.mxu0 %v356
        %358 = vmatprep.subr.mxu0 0.0
        %359 = vmatpush2.msra.mxu0 0.0
        %360 = vmatprep.subr.mxu0 0.0
        %361 = vmatpush2.msra.mxu0 0.0
        %362 = vmatprep.subr.mxu0 0.0
        %363 = vmatpush2.msra.mxu0 0.0
        %364 = vmatprep.subr.mxu0 0.0
        %365 = vmatpush2.msra.mxu0 0.0
        %366 = vmatprep.subr.mxu0 0.0
        %367 = vmatpush2.msra.mxu0 0.0
        %368 = vmatprep.subr.mxu0 0.0
        %369 = vmatpush2.msra.mxu0 0.0
        %370 = vmatprep.subr.mxu0 0.0
        %371 = vmatpush2.msra.mxu0 0.0
        %372 = vmatprep.subr.mxu0 0.0
        %373 = vmatpush2.msra.mxu0 0.0
        %374 = vmatprep.subr.mxu0 0.0
        %375 = vmatpush2.msra.mxu0 0.0
        %376 = vmatprep.subr.mxu0 0.0
        %377 = vmatpush2.msra.mxu0 0.0
        %378 = vmatprep.subr.mxu0 0.0
        %379 = vmatpush2.msra.mxu0 0.0
        %380 = vmatprep.subr.mxu0 0.0
        %381 = vmatpush2.msra.mxu0 0.0
        %382 = vmatprep.subr.mxu0 0.0
        %383 = vmatpush2.msra.mxu0 0.0
        %384 = vmatprep.subr.mxu0 0.0
        %385 = vmatpush2.msra.mxu0 0.0
        %386 = vmatprep.subr.mxu0 0.0
        %387 = vmatpush2.msra.mxu0 0.0
        %388 = vmatprep.subr.mxu0 0.0
        %389 = vmatpush2.msra.mxu0 0.0
        %390 = vmatprep.mubr.f32.mxu0 0.0
        %v391 = vand.u32 %v224, 4294901760
        %392 = vmatmul.mubr.f32.gmra.mxu0 %v391
        %v393 = vpop.f32.mrf.mxu0
        %v394 = vadd.f32 %v303, %v393
        %v395 = vpop.f32.mrf.mxu0
        %396 = vmatprep.mubr.f32.mxu0 0.0
        %v397 = vand.u32 %v227, 4294901760
        %398 = vmatmul.mubr.f32.gmra.mxu0 %v397
        %v399 = vpop.f32.mrf.mxu0
        %v400 = vadd.f32 %v313, %v399
        %v401 = vpop.f32.mrf.mxu0
        %402 = vdwg.mxu0
        %403 = vmatprep.subr.mxu0 0.0
        %404 = vmatpush1.msra.mxu0 0.0
        %405 = vmatprep.subr.mxu0 0.0
        %406 = vmatpush1.msra.mxu0 0.0
        %407 = vmatprep.subr.mxu0 0.0
        %408 = vmatpush1.msra.mxu0 0.0
        %409 = vmatprep.subr.mxu0 0.0
        %410 = vmatpush1.msra.mxu0 0.0
        %411 = vmatprep.subr.mxu0 0.0
        %412 = vmatpush1.msra.mxu0 0.0
        %413 = vmatprep.subr.mxu0 0.0
        %414 = vmatpush1.msra.mxu0 0.0
        %415 = vmatprep.subr.mxu0 0.0
        %416 = vmatpush1.msra.mxu0 0.0
        %417 = vmatprep.subr.mxu0 0.0
        %418 = vmatpush1.msra.mxu0 0.0
        %419 = vmatprep.subr.mxu0 0.0
        %420 = vmatpush1.msra.mxu0 0.0
        %421 = vmatprep.subr.mxu0 0.0
        %422 = vmatpush1.msra.mxu0 0.0
        %423 = vmatprep.subr.mxu0 0.0
        %424 = vmatpush1.msra.mxu0 0.0
        %425 = vmatprep.subr.mxu0 0.0
        %426 = vmatpush1.msra.mxu0 0.0
        %427 = vmatprep.subr.mxu0 0.0
        %428 = vmatpush1.msra.mxu0 0.0
        %429 = vmatprep.subr.mxu0 0.0
        %430 = vmatpush1.msra.mxu0 0.0
        %431 = vmatprep.subr.mxu0 0.0
        %v432 = vand.u32 %v217, 4294901760
        %v433 = vsub.f32 %v217, %v432
        %434 = vmatpush1.msra.mxu0 %v433
        %435 = vmatprep.subr.mxu0 0.0
        %v436 = vand.u32 %v216, 4294901760
        %v437 = vsub.f32 %v216, %v436
        %438 = vmatpush1.msra.mxu0 %v437
        %439 = vmatprep.subr.mxu0 0.0
        %440 = vmatpush2.msra.mxu0 0.0
        %441 = vmatprep.subr.mxu0 0.0
        %442 = vmatpush2.msra.mxu0 0.0
        %443 = vmatprep.subr.mxu0 0.0
        %444 = vmatpush2.msra.mxu0 0.0
        %445 = vmatprep.subr.mxu0 0.0
        %446 = vmatpush2.msra.mxu0 0.0
        %447 = vmatprep.subr.mxu0 0.0
        %448 = vmatpush2.msra.mxu0 0.0
        %449 = vmatprep.subr.mxu0 0.0
        %450 = vmatpush2.msra.mxu0 0.0
        %451 = vmatprep.subr.mxu0 0.0
        %452 = vmatpush2.msra.mxu0 0.0
        %453 = vmatprep.subr.mxu0 0.0
        %454 = vmatpush2.msra.mxu0 0.0
        %455 = vmatprep.subr.mxu0 0.0
        %456 = vmatpush2.msra.mxu0 0.0
        %457 = vmatprep.subr.mxu0 0.0
        %458 = vmatpush2.msra.mxu0 0.0
        %459 = vmatprep.subr.mxu0 0.0
        %460 = vmatpush2.msra.mxu0 0.0
        %461 = vmatprep.subr.mxu0 0.0
        %462 = vmatpush2.msra.mxu0 0.0
        %463 = vmatprep.subr.mxu0 0.0
        %464 = vmatpush2.msra.mxu0 0.0
        %465 = vmatprep.subr.mxu0 0.0
        %466 = vmatpush2.msra.mxu0 0.0
        %467 = vmatprep.subr.mxu0 0.0
        %468 = vmatpush2.msra.mxu0 0.0
        %469 = vmatprep.subr.mxu0 0.0
        %470 = vmatpush2.msra.mxu0 0.0
        %471 = vmatprep.mubr.f32.mxu0 0.0
        %v472 = vand.u32 %v224, 4294901760
        %v473 = vsub.f32 %v224, %v472
        %474 = vmatmul.mubr.f32.gmra.mxu0 %v473
        %v475 = vpop.f32.mrf.mxu0
        %v476 = vadd.f32 %v394, %v475
        %v477 = vpop.f32.mrf.mxu0
        %478 = vmatprep.mubr.f32.mxu0 0.0
        %v479 = vand.u32 %v227, 4294901760
        %v480 = vsub.f32 %v227, %v479
        %481 = vmatmul.mubr.f32.gmra.mxu0 %v480
        %v482 = vpop.f32.mrf.mxu0
        %v483 = vadd.f32 %v400, %v482
        %v484 = vpop.f32.mrf.mxu0
        %485 = vdwg.mxu0
        %486 = vmatprep.subr.mxu0 0.0
        %487 = vmatpush1.msra.mxu0 0.0
        %488 = vmatprep.subr.mxu0 0.0
        %489 = vmatpush1.msra.mxu0 0.0
        %490 = vmatprep.subr.mxu0 0.0
        %491 = vmatpush1.msra.mxu0 0.0
        %492 = vmatprep.subr.mxu0 0.0
        %493 = vmatpush1.msra.mxu0 0.0
        %494 = vmatprep.subr.mxu0 0.0
        %495 = vmatpush1.msra.mxu0 0.0
        %496 = vmatprep.subr.mxu0 0.0
        %497 = vmatpush1.msra.mxu0 0.0
        %498 = vmatprep.subr.mxu0 0.0
        %499 = vmatpush1.msra.mxu0 0.0
        %500 = vmatprep.subr.mxu0 0.0
        %501 = vmatpush1.msra.mxu0 0.0
        %502 = vmatprep.subr.mxu0 0.0
        %503 = vmatpush1.msra.mxu0 0.0
        %504 = vmatprep.subr.mxu0 0.0
        %505 = vmatpush1.msra.mxu0 0.0
        %506 = vmatprep.subr.mxu0 0.0
        %507 = vmatpush1.msra.mxu0 0.0
        %508 = vmatprep.subr.mxu0 0.0
        %509 = vmatpush1.msra.mxu0 0.0
        %510 = vmatprep.subr.mxu0 0.0
        %511 = vmatpush1.msra.mxu0 0.0
        %512 = vmatprep.subr.mxu0 0.0
        %513 = vmatpush1.msra.mxu0 0.0
        %514 = vmatprep.subr.mxu0 0.0
        %v515 = vand.u32 %v217, 4294901760
        %516 = vmatpush1.msra.mxu0 %v515
        %517 = vmatprep.subr.mxu0 0.0
        %v518 = vand.u32 %v216, 4294901760
        %519 = vmatpush1.msra.mxu0 %v518
        %520 = vmatprep.subr.mxu0 0.0
        %521 = vmatpush2.msra.mxu0 0.0
        %522 = vmatprep.subr.mxu0 0.0
        %523 = vmatpush2.msra.mxu0 0.0
        %524 = vmatprep.subr.mxu0 0.0
        %525 = vmatpush2.msra.mxu0 0.0
        %526 = vmatprep.subr.mxu0 0.0
        %527 = vmatpush2.msra.mxu0 0.0
        %528 = vmatprep.subr.mxu0 0.0
        %529 = vmatpush2.msra.mxu0 0.0
        %530 = vmatprep.subr.mxu0 0.0
        %531 = vmatpush2.msra.mxu0 0.0
        %532 = vmatprep.subr.mxu0 0.0
        %533 = vmatpush2.msra.mxu0 0.0
        %534 = vmatprep.subr.mxu0 0.0
        %535 = vmatpush2.msra.mxu0 0.0
        %536 = vmatprep.subr.mxu0 0.0
        %537 = vmatpush2.msra.mxu0 0.0
        %538 = vmatprep.subr.mxu0 0.0
        %539 = vmatpush2.msra.mxu0 0.0
        %540 = vmatprep.subr.mxu0 0.0
        %541 = vmatpush2.msra.mxu0 0.0
        %542 = vmatprep.subr.mxu0 0.0
        %543 = vmatpush2.msra.mxu0 0.0
        %544 = vmatprep.subr.mxu0 0.0
        %545 = vmatpush2.msra.mxu0 0.0
        %546 = vmatprep.subr.mxu0 0.0
        %547 = vmatpush2.msra.mxu0 0.0
        %548 = vmatprep.subr.mxu0 0.0
        %549 = vmatpush2.msra.mxu0 0.0
        %550 = vmatprep.subr.mxu0 0.0
        %551 = vmatpush2.msra.mxu0 0.0
        %552 = vmatprep.mubr.f32.mxu0 0.0
        %v553 = vand.u32 %v224, 4294901760
        %v554 = vsub.f32 %v224, %v553
        %v555 = vand.u32 %v554, 4294901760
        %556 = vmatmul.mubr.f32.gmra.mxu0 %v555
        %v557 = vpop.f32.mrf.mxu0
        %v558 = vadd.f32 %v476, %v557
        %v559 = vpop.f32.mrf.mxu0
        %560 = vmatprep.mubr.f32.mxu0 0.0
        %v561 = vand.u32 %v227, 4294901760
        %v562 = vsub.f32 %v227, %v561
        %v563 = vand.u32 %v562, 4294901760
        %564 = vmatmul.mubr.f32.gmra.mxu0 %v563
        %v565 = vpop.f32.mrf.mxu0
        %v566 = vadd.f32 %v483, %v565
        %v567 = vpop.f32.mrf.mxu0
        %568 = vdwg.mxu0
        %569 = vmatprep.subr.mxu0 0.0
        %570 = vmatpush1.msra.mxu0 0.0
        %571 = vmatprep.subr.mxu0 0.0
        %572 = vmatpush1.msra.mxu0 0.0
        %573 = vmatprep.subr.mxu0 0.0
        %574 = vmatpush1.msra.mxu0 0.0
        %575 = vmatprep.subr.mxu0 0.0
        %576 = vmatpush1.msra.mxu0 0.0
        %577 = vmatprep.subr.mxu0 0.0
        %578 = vmatpush1.msra.mxu0 0.0
        %579 = vmatprep.subr.mxu0 0.0
        %580 = vmatpush1.msra.mxu0 0.0
        %581 = vmatprep.subr.mxu0 0.0
        %582 = vmatpush1.msra.mxu0 0.0
        %583 = vmatprep.subr.mxu0 0.0
        %584 = vmatpush1.msra.mxu0 0.0
        %585 = vmatprep.subr.mxu0 0.0
        %586 = vmatpush1.msra.mxu0 0.0
        %587 = vmatprep.subr.mxu0 0.0
        %588 = vmatpush1.msra.mxu0 0.0
        %589 = vmatprep.subr.mxu0 0.0
        %590 = vmatpush1.msra.mxu0 0.0
        %591 = vmatprep.subr.mxu0 0.0
        %592 = vmatpush1.msra.mxu0 0.0
        %593 = vmatprep.subr.mxu0 0.0
        %594 = vmatpush1.msra.mxu0 0.0
        %595 = vmatprep.subr.mxu0 0.0
        %596 = vmatpush1.msra.mxu0 0.0
        %597 = vmatprep.subr.mxu0 0.0
        %v598 = vand.u32 %v217, 4294901760
        %v599 = vsub.f32 %v217, %v598
        %v600 = vand.u32 %v599, 4294901760
        %601 = vmatpush1.msra.mxu0 %v600
        %602 = vmatprep.subr.mxu0 0.0
        %v603 = vand.u32 %v216, 4294901760
        %v604 = vsub.f32 %v216, %v603
        %v605 = vand.u32 %v604, 4294901760
        %606 = vmatpush1.msra.mxu0 %v605
        %607 = vmatprep.subr.mxu0 0.0
        %608 = vmatpush2.msra.mxu0 0.0
        %609 = vmatprep.subr.mxu0 0.0
        %610 = vmatpush2.msra.mxu0 0.0
        %611 = vmatprep.subr.mxu0 0.0
        %612 = vmatpush2.msra.mxu0 0.0
        %613 = vmatprep.subr.mxu0 0.0
        %614 = vmatpush2.msra.mxu0 0.0
        %615 = vmatprep.subr.mxu0 0.0
        %616 = vmatpush2.msra.mxu0 0.0
        %617 = vmatprep.subr.mxu0 0.0
        %618 = vmatpush2.msra.mxu0 0.0
        %619 = vmatprep.subr.mxu0 0.0
        %620 = vmatpush2.msra.mxu0 0.0
        %621 = vmatprep.subr.mxu0 0.0
        %622 = vmatpush2.msra.mxu0 0.0
        %623 = vmatprep.subr.mxu0 0.0
        %624 = vmatpush2.msra.mxu0 0.0
        %625 = vmatprep.subr.mxu0 0.0
        %626 = vmatpush2.msra.mxu0 0.0
        %627 = vmatprep.subr.mxu0 0.0
        %628 = vmatpush2.msra.mxu0 0.0
        %629 = vmatprep.subr.mxu0 0.0
        %630 = vmatpush2.msra.mxu0 0.0
        %631 = vmatprep.subr.mxu0 0.0
        %632 = vmatpush2.msra.mxu0 0.0
        %633 = vmatprep.subr.mxu0 0.0
        %634 = vmatpush2.msra.mxu0 0.0
        %635 = vmatprep.subr.mxu0 0.0
        %636 = vmatpush2.msra.mxu0 0.0
        %637 = vmatprep.subr.mxu0 0.0
        %638 = vmatpush2.msra.mxu0 0.0
        %639 = vmatprep.mubr.f32.mxu0 0.0
        %v640 = vand.u32 %v224, 4294901760
        %641 = vmatmul.mubr.f32.gmra.mxu0 %v640
        %v642 = vpop.f32.mrf.mxu0
        %v643 = vadd.f32 %v558, %v642
        %v644 = vpop.f32.mrf.mxu0
        %645 = vmatprep.mubr.f32.mxu0 0.0
        %v646 = vand.u32 %v227, 4294901760
        %647 = vmatmul.mubr.f32.gmra.mxu0 %v646
        %v648 = vpop.f32.mrf.mxu0
        %v649 = vadd.f32 %v566, %v648
        %v650 = vpop.f32.mrf.mxu0
        %651 = vdwg.mxu0
        %652 = vmatprep.subr.mxu0 0.0
        %653 = vmatpush1.msra.mxu0 0.0
        %654 = vmatprep.subr.mxu0 0.0
        %655 = vmatpush1.msra.mxu0 0.0
        %656 = vmatprep.subr.mxu0 0.0
        %657 = vmatpush1.msra.mxu0 0.0
        %658 = vmatprep.subr.mxu0 0.0
        %659 = vmatpush1.msra.mxu0 0.0
        %660 = vmatprep.subr.mxu0 0.0
        %661 = vmatpush1.msra.mxu0 0.0
        %662 = vmatprep.subr.mxu0 0.0
        %663 = vmatpush1.msra.mxu0 0.0
        %664 = vmatprep.subr.mxu0 0.0
        %665 = vmatpush1.msra.mxu0 0.0
        %666 = vmatprep.subr.mxu0 0.0
        %667 = vmatpush1.msra.mxu0 0.0
        %668 = vmatprep.subr.mxu0 0.0
        %669 = vmatpush1.msra.mxu0 0.0
        %670 = vmatprep.subr.mxu0 0.0
        %671 = vmatpush1.msra.mxu0 0.0
        %672 = vmatprep.subr.mxu0 0.0
        %673 = vmatpush1.msra.mxu0 0.0
        %674 = vmatprep.subr.mxu0 0.0
        %675 = vmatpush1.msra.mxu0 0.0
        %676 = vmatprep.subr.mxu0 0.0
        %677 = vmatpush1.msra.mxu0 0.0
        %678 = vmatprep.subr.mxu0 0.0
        %679 = vmatpush1.msra.mxu0 0.0
        %680 = vmatprep.subr.mxu0 0.0
        %v681 = vand.u32 %v217, 4294901760
        %682 = vmatpush1.msra.mxu0 %v681
        %683 = vmatprep.subr.mxu0 0.0
        %v684 = vand.u32 %v216, 4294901760
        %685 = vmatpush1.msra.mxu0 %v684
        %686 = vmatprep.subr.mxu0 0.0
        %687 = vmatpush2.msra.mxu0 0.0
        %688 = vmatprep.subr.mxu0 0.0
        %689 = vmatpush2.msra.mxu0 0.0
        %690 = vmatprep.subr.mxu0 0.0
        %691 = vmatpush2.msra.mxu0 0.0
        %692 = vmatprep.subr.mxu0 0.0
        %693 = vmatpush2.msra.mxu0 0.0
        %694 = vmatprep.subr.mxu0 0.0
        %695 = vmatpush2.msra.mxu0 0.0
        %696 = vmatprep.subr.mxu0 0.0
        %697 = vmatpush2.msra.mxu0 0.0
        %698 = vmatprep.subr.mxu0 0.0
        %699 = vmatpush2.msra.mxu0 0.0
        %700 = vmatprep.subr.mxu0 0.0
        %701 = vmatpush2.msra.mxu0 0.0
        %702 = vmatprep.subr.mxu0 0.0
        %703 = vmatpush2.msra.mxu0 0.0
        %704 = vmatprep.subr.mxu0 0.0
        %705 = vmatpush2.msra.mxu0 0.0
        %706 = vmatprep.subr.mxu0 0.0
        %707 = vmatpush2.msra.mxu0 0.0
        %708 = vmatprep.subr.mxu0 0.0
        %709 = vmatpush2.msra.mxu0 0.0
        %710 = vmatprep.subr.mxu0 0.0
        %711 = vmatpush2.msra.mxu0 0.0
        %712 = vmatprep.subr.mxu0 0.0
        %713 = vmatpush2.msra.mxu0 0.0
        %714 = vmatprep.subr.mxu0 0.0
        %715 = vmatpush2.msra.mxu0 0.0
        %716 = vmatprep.subr.mxu0 0.0
        %717 = vmatpush2.msra.mxu0 0.0
        %718 = vmatprep.mubr.f32.mxu0 0.0
        %v719 = vand.u32 %v224, 4294901760
        %720 = vmatmul.mubr.f32.gmra.mxu0 %v719
        %v721 = vpop.f32.mrf.mxu0
        %v722 = vadd.f32 %v643, %v721
        %v723 = vpop.f32.mrf.mxu0
        %724 = vmatprep.mubr.f32.mxu0 0.0
        %v725 = vand.u32 %v227, 4294901760
        %726 = vmatmul.mubr.f32.gmra.mxu0 %v725
        %v727 = vpop.f32.mrf.mxu0
        %v728 = vadd.f32 %v649, %v727
        %v729 = vpop.f32.mrf.mxu0
        %730 = vdwg.mxu0
        %v732 = vsel %vm222, %v214, 0
        %v735 = vsel %vm222, %v215, 0
        %737 = vmatprep.subr.mxu0 0.0
        %738 = vmatpush1.msra.mxu0 0.0
        %739 = vmatprep.subr.mxu0 0.0
        %740 = vmatpush1.msra.mxu0 0.0
        %741 = vmatprep.subr.mxu0 0.0
        %742 = vmatpush1.msra.mxu0 0.0
        %743 = vmatprep.subr.mxu0 0.0
        %744 = vmatpush1.msra.mxu0 0.0
        %745 = vmatprep.subr.mxu0 0.0
        %746 = vmatpush1.msra.mxu0 0.0
        %747 = vmatprep.subr.mxu0 0.0
        %748 = vmatpush1.msra.mxu0 0.0
        %749 = vmatprep.subr.mxu0 0.0
        %750 = vmatpush1.msra.mxu0 0.0
        %751 = vmatprep.subr.mxu0 0.0
        %752 = vmatpush1.msra.mxu0 0.0
        %753 = vmatprep.subr.mxu0 0.0
        %754 = vmatpush1.msra.mxu0 0.0
        %755 = vmatprep.subr.mxu0 0.0
        %756 = vmatpush1.msra.mxu0 0.0
        %757 = vmatprep.subr.mxu0 0.0
        %758 = vmatpush1.msra.mxu0 0.0
        %759 = vmatprep.subr.mxu0 0.0
        %760 = vmatpush1.msra.mxu0 0.0
        %761 = vmatprep.subr.mxu0 0.0
        %762 = vmatpush1.msra.mxu0 0.0
        %763 = vmatprep.subr.mxu0 0.0
        %764 = vmatpush1.msra.mxu0 0.0
        %765 = vmatprep.subr.mxu0 0.0
        %v766 = vand.u32 %v217, 4294901760
        %767 = vmatpush1.msra.mxu0 %v766
        %768 = vmatprep.subr.mxu0 0.0
        %v769 = vand.u32 %v216, 4294901760
        %770 = vmatpush1.msra.mxu0 %v769
        %771 = vmatprep.subr.mxu0 0.0
        %772 = vmatpush2.msra.mxu0 0.0
        %773 = vmatprep.subr.mxu0 0.0
        %774 = vmatpush2.msra.mxu0 0.0
        %775 = vmatprep.subr.mxu0 0.0
        %776 = vmatpush2.msra.mxu0 0.0
        %777 = vmatprep.subr.mxu0 0.0
        %778 = vmatpush2.msra.mxu0 0.0
        %779 = vmatprep.subr.mxu0 0.0
        %780 = vmatpush2.msra.mxu0 0.0
        %781 = vmatprep.subr.mxu0 0.0
        %782 = vmatpush2.msra.mxu0 0.0
        %783 = vmatprep.subr.mxu0 0.0
        %784 = vmatpush2.msra.mxu0 0.0
        %785 = vmatprep.subr.mxu0 0.0
        %786 = vmatpush2.msra.mxu0 0.0
        %787 = vmatprep.subr.mxu0 0.0
        %788 = vmatpush2.msra.mxu0 0.0
        %789 = vmatprep.subr.mxu0 0.0
        %790 = vmatpush2.msra.mxu0 0.0
        %791 = vmatprep.subr.mxu0 0.0
        %792 = vmatpush2.msra.mxu0 0.0
        %793 = vmatprep.subr.mxu0 0.0
        %794 = vmatpush2.msra.mxu0 0.0
        %795 = vmatprep.subr.mxu0 0.0
        %796 = vmatpush2.msra.mxu0 0.0
        %797 = vmatprep.subr.mxu0 0.0
        %798 = vmatpush2.msra.mxu0 0.0
        %799 = vmatprep.subr.mxu0 0.0
        %800 = vmatpush2.msra.mxu0 0.0
        %801 = vmatprep.subr.mxu0 0.0
        %802 = vmatpush2.msra.mxu0 0.0
        %803 = vmatprep.mubr.f32.mxu0 0.0
        %v804 = vand.u32 %v732, 4294901760
        %v805 = vsub.f32 %v732, %v804
        %v806 = vand.u32 %v805, 4294901760
        %v807 = vsub.f32 %v805, %v806
        %v808 = vand.u32 %v807, 4294901760
        %809 = vmatmul.mubr.f32.gmra.mxu0 %v808
        %v810 = vpop.f32.mrf.mxu0
        %v811 = vadd.f32 0.0, %v810
        %v812 = vpop.f32.mrf.mxu0
        %813 = vmatprep.mubr.f32.mxu0 0.0
        %v814 = vand.u32 %v735, 4294901760
        %v815 = vsub.f32 %v735, %v814
        %v816 = vand.u32 %v815, 4294901760
        %v817 = vsub.f32 %v815, %v816
        %v818 = vand.u32 %v817, 4294901760
        %819 = vmatmul.mubr.f32.gmra.mxu0 %v818
        %v820 = vpop.f32.mrf.mxu0
        %v821 = vadd.f32 0.0, %v820
        %v822 = vpop.f32.mrf.mxu0
        %823 = vdwg.mxu0
        %824 = vmatprep.subr.mxu0 0.0
        %825 = vmatpush1.msra.mxu0 0.0
        %826 = vmatprep.subr.mxu0 0.0
        %827 = vmatpush1.msra.mxu0 0.0
        %828 = vmatprep.subr.mxu0 0.0
        %829 = vmatpush1.msra.mxu0 0.0
        %830 = vmatprep.subr.mxu0 0.0
        %831 = vmatpush1.msra.mxu0 0.0
        %832 = vmatprep.subr.mxu0 0.0
        %833 = vmatpush1.msra.mxu0 0.0
        %834 = vmatprep.subr.mxu0 0.0
        %835 = vmatpush1.msra.mxu0 0.0
        %836 = vmatprep.subr.mxu0 0.0
        %837 = vmatpush1.msra.mxu0 0.0
        %838 = vmatprep.subr.mxu0 0.0
        %839 = vmatpush1.msra.mxu0 0.0
        %840 = vmatprep.subr.mxu0 0.0
        %841 = vmatpush1.msra.mxu0 0.0
        %842 = vmatprep.subr.mxu0 0.0
        %843 = vmatpush1.msra.mxu0 0.0
        %844 = vmatprep.subr.mxu0 0.0
        %845 = vmatpush1.msra.mxu0 0.0
        %846 = vmatprep.subr.mxu0 0.0
        %847 = vmatpush1.msra.mxu0 0.0
        %848 = vmatprep.subr.mxu0 0.0
        %849 = vmatpush1.msra.mxu0 0.0
        %850 = vmatprep.subr.mxu0 0.0
        %851 = vmatpush1.msra.mxu0 0.0
        %852 = vmatprep.subr.mxu0 0.0
        %v853 = vand.u32 %v217, 4294901760
        %v854 = vsub.f32 %v217, %v853
        %v855 = vand.u32 %v854, 4294901760
        %v856 = vsub.f32 %v854, %v855
        %v857 = vand.u32 %v856, 4294901760
        %858 = vmatpush1.msra.mxu0 %v857
        %859 = vmatprep.subr.mxu0 0.0
        %v860 = vand.u32 %v216, 4294901760
        %v861 = vsub.f32 %v216, %v860
        %v862 = vand.u32 %v861, 4294901760
        %v863 = vsub.f32 %v861, %v862
        %v864 = vand.u32 %v863, 4294901760
        %865 = vmatpush1.msra.mxu0 %v864
        %866 = vmatprep.subr.mxu0 0.0
        %867 = vmatpush2.msra.mxu0 0.0
        %868 = vmatprep.subr.mxu0 0.0
        %869 = vmatpush2.msra.mxu0 0.0
        %870 = vmatprep.subr.mxu0 0.0
        %871 = vmatpush2.msra.mxu0 0.0
        %872 = vmatprep.subr.mxu0 0.0
        %873 = vmatpush2.msra.mxu0 0.0
        %874 = vmatprep.subr.mxu0 0.0
        %875 = vmatpush2.msra.mxu0 0.0
        %876 = vmatprep.subr.mxu0 0.0
        %877 = vmatpush2.msra.mxu0 0.0
        %878 = vmatprep.subr.mxu0 0.0
        %879 = vmatpush2.msra.mxu0 0.0
        %880 = vmatprep.subr.mxu0 0.0
        %881 = vmatpush2.msra.mxu0 0.0
        %882 = vmatprep.subr.mxu0 0.0
        %883 = vmatpush2.msra.mxu0 0.0
        %884 = vmatprep.subr.mxu0 0.0
        %885 = vmatpush2.msra.mxu0 0.0
        %886 = vmatprep.subr.mxu0 0.0
        %887 = vmatpush2.msra.mxu0 0.0
        %888 = vmatprep.subr.mxu0 0.0
        %889 = vmatpush2.msra.mxu0 0.0
        %890 = vmatprep.subr.mxu0 0.0
        %891 = vmatpush2.msra.mxu0 0.0
        %892 = vmatprep.subr.mxu0 0.0
        %893 = vmatpush2.msra.mxu0 0.0
        %894 = vmatprep.subr.mxu0 0.0
        %895 = vmatpush2.msra.mxu0 0.0
        %896 = vmatprep.subr.mxu0 0.0
        %897 = vmatpush2.msra.mxu0 0.0
        %898 = vmatprep.mubr.f32.mxu0 0.0
        %v899 = vand.u32 %v732, 4294901760
        %900 = vmatmul.mubr.f32.gmra.mxu0 %v899
        %v901 = vpop.f32.mrf.mxu0
        %v902 = vadd.f32 %v811, %v901
        %v903 = vpop.f32.mrf.mxu0
        %904 = vmatprep.mubr.f32.mxu0 0.0
        %v905 = vand.u32 %v735, 4294901760
        %906 = vmatmul.mubr.f32.gmra.mxu0 %v905
        %v907 = vpop.f32.mrf.mxu0
        %v908 = vadd.f32 %v821, %v907
        %v909 = vpop.f32.mrf.mxu0
        %910 = vdwg.mxu0
        %911 = vmatprep.subr.mxu0 0.0
        %912 = vmatpush1.msra.mxu0 0.0
        %913 = vmatprep.subr.mxu0 0.0
        %914 = vmatpush1.msra.mxu0 0.0
        %915 = vmatprep.subr.mxu0 0.0
        %916 = vmatpush1.msra.mxu0 0.0
        %917 = vmatprep.subr.mxu0 0.0
        %918 = vmatpush1.msra.mxu0 0.0
        %919 = vmatprep.subr.mxu0 0.0
        %920 = vmatpush1.msra.mxu0 0.0
        %921 = vmatprep.subr.mxu0 0.0
        %922 = vmatpush1.msra.mxu0 0.0
        %923 = vmatprep.subr.mxu0 0.0
        %924 = vmatpush1.msra.mxu0 0.0
        %925 = vmatprep.subr.mxu0 0.0
        %926 = vmatpush1.msra.mxu0 0.0
        %927 = vmatprep.subr.mxu0 0.0
        %928 = vmatpush1.msra.mxu0 0.0
        %929 = vmatprep.subr.mxu0 0.0
        %930 = vmatpush1.msra.mxu0 0.0
        %931 = vmatprep.subr.mxu0 0.0
        %932 = vmatpush1.msra.mxu0 0.0
        %933 = vmatprep.subr.mxu0 0.0
        %934 = vmatpush1.msra.mxu0 0.0
        %935 = vmatprep.subr.mxu0 0.0
        %936 = vmatpush1.msra.mxu0 0.0
        %937 = vmatprep.subr.mxu0 0.0
        %938 = vmatpush1.msra.mxu0 0.0
        %939 = vmatprep.subr.mxu0 0.0
        %v940 = vand.u32 %v217, 4294901760
        %v941 = vsub.f32 %v217, %v940
        %942 = vmatpush1.msra.mxu0 %v941
        %943 = vmatprep.subr.mxu0 0.0
        %v944 = vand.u32 %v216, 4294901760
        %v945 = vsub.f32 %v216, %v944
        %946 = vmatpush1.msra.mxu0 %v945
        %947 = vmatprep.subr.mxu0 0.0
        %948 = vmatpush2.msra.mxu0 0.0
        %949 = vmatprep.subr.mxu0 0.0
        %950 = vmatpush2.msra.mxu0 0.0
        %951 = vmatprep.subr.mxu0 0.0
        %952 = vmatpush2.msra.mxu0 0.0
        %953 = vmatprep.subr.mxu0 0.0
        %954 = vmatpush2.msra.mxu0 0.0
        %955 = vmatprep.subr.mxu0 0.0
        %956 = vmatpush2.msra.mxu0 0.0
        %957 = vmatprep.subr.mxu0 0.0
        %958 = vmatpush2.msra.mxu0 0.0
        %959 = vmatprep.subr.mxu0 0.0
        %960 = vmatpush2.msra.mxu0 0.0
        %961 = vmatprep.subr.mxu0 0.0
        %962 = vmatpush2.msra.mxu0 0.0
        %963 = vmatprep.subr.mxu0 0.0
        %964 = vmatpush2.msra.mxu0 0.0
        %965 = vmatprep.subr.mxu0 0.0
        %966 = vmatpush2.msra.mxu0 0.0
        %967 = vmatprep.subr.mxu0 0.0
        %968 = vmatpush2.msra.mxu0 0.0
        %969 = vmatprep.subr.mxu0 0.0
        %970 = vmatpush2.msra.mxu0 0.0
        %971 = vmatprep.subr.mxu0 0.0
        %972 = vmatpush2.msra.mxu0 0.0
        %973 = vmatprep.subr.mxu0 0.0
        %974 = vmatpush2.msra.mxu0 0.0
        %975 = vmatprep.subr.mxu0 0.0
        %976 = vmatpush2.msra.mxu0 0.0
        %977 = vmatprep.subr.mxu0 0.0
        %978 = vmatpush2.msra.mxu0 0.0
        %979 = vmatprep.mubr.f32.mxu0 0.0
        %v980 = vand.u32 %v732, 4294901760
        %v981 = vsub.f32 %v732, %v980
        %982 = vmatmul.mubr.f32.gmra.mxu0 %v981
        %v983 = vpop.f32.mrf.mxu0
        %v984 = vadd.f32 %v902, %v983
        %v985 = vpop.f32.mrf.mxu0
        %986 = vmatprep.mubr.f32.mxu0 0.0
        %v987 = vand.u32 %v735, 4294901760
        %v988 = vsub.f32 %v735, %v987
        %989 = vmatmul.mubr.f32.gmra.mxu0 %v988
        %v990 = vpop.f32.mrf.mxu0
        %v991 = vadd.f32 %v908, %v990
        %v992 = vpop.f32.mrf.mxu0
        %993 = vdwg.mxu0
        %994 = vmatprep.subr.mxu0 0.0
        %995 = vmatpush1.msra.mxu0 0.0
        %996 = vmatprep.subr.mxu0 0.0
        %997 = vmatpush1.msra.mxu0 0.0
        %998 = vmatprep.subr.mxu0 0.0
        %999 = vmatpush1.msra.mxu0 0.0
        %1000 = vmatprep.subr.mxu0 0.0
        %1001 = vmatpush1.msra.mxu0 0.0
        %1002 = vmatprep.subr.mxu0 0.0
        %1003 = vmatpush1.msra.mxu0 0.0
        %1004 = vmatprep.subr.mxu0 0.0
        %1005 = vmatpush1.msra.mxu0 0.0
        %1006 = vmatprep.subr.mxu0 0.0
        %1007 = vmatpush1.msra.mxu0 0.0
        %1008 = vmatprep.subr.mxu0 0.0
        %1009 = vmatpush1.msra.mxu0 0.0
        %1010 = vmatprep.subr.mxu0 0.0
        %1011 = vmatpush1.msra.mxu0 0.0
        %1012 = vmatprep.subr.mxu0 0.0
        %1013 = vmatpush1.msra.mxu0 0.0
        %1014 = vmatprep.subr.mxu0 0.0
        %1015 = vmatpush1.msra.mxu0 0.0
        %1016 = vmatprep.subr.mxu0 0.0
        %1017 = vmatpush1.msra.mxu0 0.0
        %1018 = vmatprep.subr.mxu0 0.0
        %1019 = vmatpush1.msra.mxu0 0.0
        %1020 = vmatprep.subr.mxu0 0.0
        %1021 = vmatpush1.msra.mxu0 0.0
        %1022 = vmatprep.subr.mxu0 0.0
        %v1023 = vand.u32 %v217, 4294901760
        %1024 = vmatpush1.msra.mxu0 %v1023
        %1025 = vmatprep.subr.mxu0 0.0
        %v1026 = vand.u32 %v216, 4294901760
        %1027 = vmatpush1.msra.mxu0 %v1026
        %1028 = vmatprep.subr.mxu0 0.0
        %1029 = vmatpush2.msra.mxu0 0.0
        %1030 = vmatprep.subr.mxu0 0.0
        %1031 = vmatpush2.msra.mxu0 0.0
        %1032 = vmatprep.subr.mxu0 0.0
        %1033 = vmatpush2.msra.mxu0 0.0
        %1034 = vmatprep.subr.mxu0 0.0
        %1035 = vmatpush2.msra.mxu0 0.0
        %1036 = vmatprep.subr.mxu0 0.0
        %1037 = vmatpush2.msra.mxu0 0.0
        %1038 = vmatprep.subr.mxu0 0.0
        %1039 = vmatpush2.msra.mxu0 0.0
        %1040 = vmatprep.subr.mxu0 0.0
        %1041 = vmatpush2.msra.mxu0 0.0
        %1042 = vmatprep.subr.mxu0 0.0
        %1043 = vmatpush2.msra.mxu0 0.0
        %1044 = vmatprep.subr.mxu0 0.0
        %1045 = vmatpush2.msra.mxu0 0.0
        %1046 = vmatprep.subr.mxu0 0.0
        %1047 = vmatpush2.msra.mxu0 0.0
        %1048 = vmatprep.subr.mxu0 0.0
        %1049 = vmatpush2.msra.mxu0 0.0
        %1050 = vmatprep.subr.mxu0 0.0
        %1051 = vmatpush2.msra.mxu0 0.0
        %1052 = vmatprep.subr.mxu0 0.0
        %1053 = vmatpush2.msra.mxu0 0.0
        %1054 = vmatprep.subr.mxu0 0.0
        %1055 = vmatpush2.msra.mxu0 0.0
        %1056 = vmatprep.subr.mxu0 0.0
        %1057 = vmatpush2.msra.mxu0 0.0
        %1058 = vmatprep.subr.mxu0 0.0
        %1059 = vmatpush2.msra.mxu0 0.0
        %1060 = vmatprep.mubr.f32.mxu0 0.0
        %v1061 = vand.u32 %v732, 4294901760
        %v1062 = vsub.f32 %v732, %v1061
        %v1063 = vand.u32 %v1062, 4294901760
        %1064 = vmatmul.mubr.f32.gmra.mxu0 %v1063
        %v1065 = vpop.f32.mrf.mxu0
        %v1066 = vadd.f32 %v984, %v1065
        %v1067 = vpop.f32.mrf.mxu0
        %1068 = vmatprep.mubr.f32.mxu0 0.0
        %v1069 = vand.u32 %v735, 4294901760
        %v1070 = vsub.f32 %v735, %v1069
        %v1071 = vand.u32 %v1070, 4294901760
        %1072 = vmatmul.mubr.f32.gmra.mxu0 %v1071
        %v1073 = vpop.f32.mrf.mxu0
        %v1074 = vadd.f32 %v991, %v1073
        %v1075 = vpop.f32.mrf.mxu0
        %1076 = vdwg.mxu0
        %1077 = vmatprep.subr.mxu0 0.0
        %1078 = vmatpush1.msra.mxu0 0.0
        %1079 = vmatprep.subr.mxu0 0.0
        %1080 = vmatpush1.msra.mxu0 0.0
        %1081 = vmatprep.subr.mxu0 0.0
        %1082 = vmatpush1.msra.mxu0 0.0
        %1083 = vmatprep.subr.mxu0 0.0
        %1084 = vmatpush1.msra.mxu0 0.0
        %1085 = vmatprep.subr.mxu0 0.0
        %1086 = vmatpush1.msra.mxu0 0.0
        %1087 = vmatprep.subr.mxu0 0.0
        %1088 = vmatpush1.msra.mxu0 0.0
        %1089 = vmatprep.subr.mxu0 0.0
        %1090 = vmatpush1.msra.mxu0 0.0
        %1091 = vmatprep.subr.mxu0 0.0
        %1092 = vmatpush1.msra.mxu0 0.0
        %1093 = vmatprep.subr.mxu0 0.0
        %1094 = vmatpush1.msra.mxu0 0.0
        %1095 = vmatprep.subr.mxu0 0.0
        %1096 = vmatpush1.msra.mxu0 0.0
        %1097 = vmatprep.subr.mxu0 0.0
        %1098 = vmatpush1.msra.mxu0 0.0
        %1099 = vmatprep.subr.mxu0 0.0
        %1100 = vmatpush1.msra.mxu0 0.0
        %1101 = vmatprep.subr.mxu0 0.0
        %1102 = vmatpush1.msra.mxu0 0.0
        %1103 = vmatprep.subr.mxu0 0.0
        %1104 = vmatpush1.msra.mxu0 0.0
        %1105 = vmatprep.subr.mxu0 0.0
        %v1106 = vand.u32 %v217, 4294901760
        %v1107 = vsub.f32 %v217, %v1106
        %v1108 = vand.u32 %v1107, 4294901760
        %1109 = vmatpush1.msra.mxu0 %v1108
        %1110 = vmatprep.subr.mxu0 0.0
        %v1111 = vand.u32 %v216, 4294901760
        %v1112 = vsub.f32 %v216, %v1111
        %v1113 = vand.u32 %v1112, 4294901760
        %1114 = vmatpush1.msra.mxu0 %v1113
        %1115 = vmatprep.subr.mxu0 0.0
        %1116 = vmatpush2.msra.mxu0 0.0
        %1117 = vmatprep.subr.mxu0 0.0
        %1118 = vmatpush2.msra.mxu0 0.0
        %1119 = vmatprep.subr.mxu0 0.0
        %1120 = vmatpush2.msra.mxu0 0.0
        %1121 = vmatprep.subr.mxu0 0.0
        %1122 = vmatpush2.msra.mxu0 0.0
        %1123 = vmatprep.subr.mxu0 0.0
        %1124 = vmatpush2.msra.mxu0 0.0
        %1125 = vmatprep.subr.mxu0 0.0
        %1126 = vmatpush2.msra.mxu0 0.0
        %1127 = vmatprep.subr.mxu0 0.0
        %1128 = vmatpush2.msra.mxu0 0.0
        %1129 = vmatprep.subr.mxu0 0.0
        %1130 = vmatpush2.msra.mxu0 0.0
        %1131 = vmatprep.subr.mxu0 0.0
        %1132 = vmatpush2.msra.mxu0 0.0
        %1133 = vmatprep.subr.mxu0 0.0
        %1134 = vmatpush2.msra.mxu0 0.0
        %1135 = vmatprep.subr.mxu0 0.0
        %1136 = vmatpush2.msra.mxu0 0.0
        %1137 = vmatprep.subr.mxu0 0.0
        %1138 = vmatpush2.msra.mxu0 0.0
        %1139 = vmatprep.subr.mxu0 0.0
        %1140 = vmatpush2.msra.mxu0 0.0
        %1141 = vmatprep.subr.mxu0 0.0
        %1142 = vmatpush2.msra.mxu0 0.0
        %1143 = vmatprep.subr.mxu0 0.0
        %1144 = vmatpush2.msra.mxu0 0.0
        %1145 = vmatprep.subr.mxu0 0.0
        %1146 = vmatpush2.msra.mxu0 0.0
        %1147 = vmatprep.mubr.f32.mxu0 0.0
        %v1148 = vand.u32 %v732, 4294901760
        %1149 = vmatmul.mubr.f32.gmra.mxu0 %v1148
        %v1150 = vpop.f32.mrf.mxu0
        %v1151 = vadd.f32 %v1066, %v1150
        %v1152 = vpop.f32.mrf.mxu0
        %1153 = vmatprep.mubr.f32.mxu0 0.0
        %v1154 = vand.u32 %v735, 4294901760
        %1155 = vmatmul.mubr.f32.gmra.mxu0 %v1154
        %v1156 = vpop.f32.mrf.mxu0
        %v1157 = vadd.f32 %v1074, %v1156
        %v1158 = vpop.f32.mrf.mxu0
        %1159 = vdwg.mxu0
        %1160 = vmatprep.subr.mxu0 0.0
        %1161 = vmatpush1.msra.mxu0 0.0
        %1162 = vmatprep.subr.mxu0 0.0
        %1163 = vmatpush1.msra.mxu0 0.0
        %1164 = vmatprep.subr.mxu0 0.0
        %1165 = vmatpush1.msra.mxu0 0.0
        %1166 = vmatprep.subr.mxu0 0.0
        %1167 = vmatpush1.msra.mxu0 0.0
        %1168 = vmatprep.subr.mxu0 0.0
        %1169 = vmatpush1.msra.mxu0 0.0
        %1170 = vmatprep.subr.mxu0 0.0
        %1171 = vmatpush1.msra.mxu0 0.0
        %1172 = vmatprep.subr.mxu0 0.0
        %1173 = vmatpush1.msra.mxu0 0.0
        %1174 = vmatprep.subr.mxu0 0.0
        %1175 = vmatpush1.msra.mxu0 0.0
        %1176 = vmatprep.subr.mxu0 0.0
        %1177 = vmatpush1.msra.mxu0 0.0
        %1178 = vmatprep.subr.mxu0 0.0
        %1179 = vmatpush1.msra.mxu0 0.0
        %1180 = vmatprep.subr.mxu0 0.0
        %1181 = vmatpush1.msra.mxu0 0.0
        %1182 = vmatprep.subr.mxu0 0.0
        %1183 = vmatpush1.msra.mxu0 0.0
        %1184 = vmatprep.subr.mxu0 0.0
        %1185 = vmatpush1.msra.mxu0 0.0
        %1186 = vmatprep.subr.mxu0 0.0
        %1187 = vmatpush1.msra.mxu0 0.0
        %1188 = vmatprep.subr.mxu0 0.0
        %v1189 = vand.u32 %v217, 4294901760
        %1190 = vmatpush1.msra.mxu0 %v1189
        %1191 = vmatprep.subr.mxu0 0.0
        %v1192 = vand.u32 %v216, 4294901760
        %1193 = vmatpush1.msra.mxu0 %v1192
        %1194 = vmatprep.subr.mxu0 0.0
        %1195 = vmatpush2.msra.mxu0 0.0
        %1196 = vmatprep.subr.mxu0 0.0
        %1197 = vmatpush2.msra.mxu0 0.0
        %1198 = vmatprep.subr.mxu0 0.0
        %1199 = vmatpush2.msra.mxu0 0.0
        %1200 = vmatprep.subr.mxu0 0.0
        %1201 = vmatpush2.msra.mxu0 0.0
        %1202 = vmatprep.subr.mxu0 0.0
        %1203 = vmatpush2.msra.mxu0 0.0
        %1204 = vmatprep.subr.mxu0 0.0
        %1205 = vmatpush2.msra.mxu0 0.0
        %1206 = vmatprep.subr.mxu0 0.0
        %1207 = vmatpush2.msra.mxu0 0.0
        %1208 = vmatprep.subr.mxu0 0.0
        %1209 = vmatpush2.msra.mxu0 0.0
        %1210 = vmatprep.subr.mxu0 0.0
        %1211 = vmatpush2.msra.mxu0 0.0
        %1212 = vmatprep.subr.mxu0 0.0
        %1213 = vmatpush2.msra.mxu0 0.0
        %1214 = vmatprep.subr.mxu0 0.0
        %1215 = vmatpush2.msra.mxu0 0.0
        %1216 = vmatprep.subr.mxu0 0.0
        %1217 = vmatpush2.msra.mxu0 0.0
        %1218 = vmatprep.subr.mxu0 0.0
        %1219 = vmatpush2.msra.mxu0 0.0
        %1220 = vmatprep.subr.mxu0 0.0
        %1221 = vmatpush2.msra.mxu0 0.0
        %1222 = vmatprep.subr.mxu0 0.0
        %1223 = vmatpush2.msra.mxu0 0.0
        %1224 = vmatprep.subr.mxu0 0.0
        %1225 = vmatpush2.msra.mxu0 0.0
        %1226 = vmatprep.mubr.f32.mxu0 0.0
        %v1227 = vand.u32 %v732, 4294901760
        %1228 = vmatmul.mubr.f32.gmra.mxu0 %v1227
        %v1229 = vpop.f32.mrf.mxu0
        %v1230 = vadd.f32 %v1151, %v1229
        %v1231 = vpop.f32.mrf.mxu0
        %1232 = vmatprep.mubr.f32.mxu0 0.0
        %v1233 = vand.u32 %v735, 4294901760
        %1234 = vmatmul.mubr.f32.gmra.mxu0 %v1233
        %v1235 = vpop.f32.mrf.mxu0
        %v1236 = vadd.f32 %v1157, %v1235
        %v1237 = vpop.f32.mrf.mxu0
        %1238 = vdwg.mxu0
        %v1240 = vsel %vm222, %v218, 0
        %v1243 = vsel %vm222, %v219, 0
        %v1246 = vsel %vm222, %v220, 0
        %v1249 = vsel %vm222, %v221, 0
        %1251 = vmatprep.subr.mxu0 0.0
        %1252 = vmatpush1.msra.mxu0 0.0
        %1253 = vmatprep.subr.mxu0 0.0
        %1254 = vmatpush1.msra.mxu0 0.0
        %1255 = vmatprep.subr.mxu0 0.0
        %1256 = vmatpush1.msra.mxu0 0.0
        %1257 = vmatprep.subr.mxu0 0.0
        %1258 = vmatpush1.msra.mxu0 0.0
        %1259 = vmatprep.subr.mxu0 0.0
        %1260 = vmatpush1.msra.mxu0 0.0
        %1261 = vmatprep.subr.mxu0 0.0
        %1262 = vmatpush1.msra.mxu0 0.0
        %1263 = vmatprep.subr.mxu0 0.0
        %1264 = vmatpush1.msra.mxu0 0.0
        %1265 = vmatprep.subr.mxu0 0.0
        %1266 = vmatpush1.msra.mxu0 0.0
        %1267 = vmatprep.subr.mxu0 0.0
        %1268 = vmatpush1.msra.mxu0 0.0
        %1269 = vmatprep.subr.mxu0 0.0
        %1270 = vmatpush1.msra.mxu0 0.0
        %1271 = vmatprep.subr.mxu0 0.0
        %1272 = vmatpush1.msra.mxu0 0.0
        %1273 = vmatprep.subr.mxu0 0.0
        %1274 = vmatpush1.msra.mxu0 0.0
        %1275 = vmatprep.subr.mxu0 0.0
        %1276 = vmatpush1.msra.mxu0 0.0
        %1277 = vmatprep.subr.mxu0 0.0
        %1278 = vmatpush1.msra.mxu0 0.0
        %1279 = vmatprep.subr.mxu0 0.0
        %v1280 = vand.u32 %v728, 4294901760
        %1281 = vmatpush1.msra.mxu0 %v1280
        %1282 = vmatprep.subr.mxu0 0.0
        %v1283 = vand.u32 %v722, 4294901760
        %1284 = vmatpush1.msra.mxu0 %v1283
        %1285 = vmatprep.subr.mxu0 0.0
        %1286 = vmatpush2.msra.mxu0 0.0
        %1287 = vmatprep.subr.mxu0 0.0
        %1288 = vmatpush2.msra.mxu0 0.0
        %1289 = vmatprep.subr.mxu0 0.0
        %1290 = vmatpush2.msra.mxu0 0.0
        %1291 = vmatprep.subr.mxu0 0.0
        %1292 = vmatpush2.msra.mxu0 0.0
        %1293 = vmatprep.subr.mxu0 0.0
        %1294 = vmatpush2.msra.mxu0 0.0
        %1295 = vmatprep.subr.mxu0 0.0
        %1296 = vmatpush2.msra.mxu0 0.0
        %1297 = vmatprep.subr.mxu0 0.0
        %1298 = vmatpush2.msra.mxu0 0.0
        %1299 = vmatprep.subr.mxu0 0.0
        %1300 = vmatpush2.msra.mxu0 0.0
        %1301 = vmatprep.subr.mxu0 0.0
        %1302 = vmatpush2.msra.mxu0 0.0
        %1303 = vmatprep.subr.mxu0 0.0
        %1304 = vmatpush2.msra.mxu0 0.0
        %1305 = vmatprep.subr.mxu0 0.0
        %1306 = vmatpush2.msra.mxu0 0.0
        %1307 = vmatprep.subr.mxu0 0.0
        %1308 = vmatpush2.msra.mxu0 0.0
        %1309 = vmatprep.subr.mxu0 0.0
        %1310 = vmatpush2.msra.mxu0 0.0
        %1311 = vmatprep.subr.mxu0 0.0
        %1312 = vmatpush2.msra.mxu0 0.0
        %1313 = vmatprep.subr.mxu0 0.0
        %1314 = vmatpush2.msra.mxu0 0.0
        %1315 = vmatprep.subr.mxu0 0.0
        %1316 = vmatpush2.msra.mxu0 0.0
        %1317 = vmatprep.mubr.f32.mxu0 0.0
        %v1318 = vand.u32 %v1240, 4294901760
        %v1319 = vsub.f32 %v1240, %v1318
        %v1320 = vand.u32 %v1319, 4294901760
        %v1321 = vsub.f32 %v1319, %v1320
        %v1322 = vand.u32 %v1321, 4294901760
        %1323 = vmatmul.mubr.f32.gmra.mxu0 %v1322
        %v1324 = vpop.f32.mrf.mxu0
        %v1325 = vadd.f32 0.0, %v1324
        %v1326 = vpop.f32.mrf.mxu0
        %1327 = vmatprep.mubr.f32.mxu0 0.0
        %v1328 = vand.u32 %v1243, 4294901760
        %v1329 = vsub.f32 %v1243, %v1328
        %v1330 = vand.u32 %v1329, 4294901760
        %v1331 = vsub.f32 %v1329, %v1330
        %v1332 = vand.u32 %v1331, 4294901760
        %1333 = vmatmul.mubr.f32.gmra.mxu0 %v1332
        %v1334 = vpop.f32.mrf.mxu0
        %v1335 = vadd.f32 0.0, %v1334
        %v1336 = vpop.f32.mrf.mxu0
        %1337 = vmatprep.mubr.f32.mxu0 0.0
        %v1338 = vand.u32 %v1246, 4294901760
        %v1339 = vsub.f32 %v1246, %v1338
        %v1340 = vand.u32 %v1339, 4294901760
        %v1341 = vsub.f32 %v1339, %v1340
        %v1342 = vand.u32 %v1341, 4294901760
        %1343 = vmatmul.mubr.f32.gmra.mxu0 %v1342
        %v1344 = vpop.f32.mrf.mxu0
        %v1345 = vadd.f32 0.0, %v1344
        %v1346 = vpop.f32.mrf.mxu0
        %1347 = vmatprep.mubr.f32.mxu0 0.0
        %v1348 = vand.u32 %v1249, 4294901760
        %v1349 = vsub.f32 %v1249, %v1348
        %v1350 = vand.u32 %v1349, 4294901760
        %v1351 = vsub.f32 %v1349, %v1350
        %v1352 = vand.u32 %v1351, 4294901760
        %1353 = vmatmul.mubr.f32.gmra.mxu0 %v1352
        %v1354 = vpop.f32.mrf.mxu0
        %v1355 = vadd.f32 0.0, %v1354
        %v1356 = vpop.f32.mrf.mxu0
        %1357 = vdwg.mxu0
        %1358 = vmatprep.subr.mxu0 0.0
        %1359 = vmatpush1.msra.mxu0 0.0
        %1360 = vmatprep.subr.mxu0 0.0
        %1361 = vmatpush1.msra.mxu0 0.0
        %1362 = vmatprep.subr.mxu0 0.0
        %1363 = vmatpush1.msra.mxu0 0.0
        %1364 = vmatprep.subr.mxu0 0.0
        %1365 = vmatpush1.msra.mxu0 0.0
        %1366 = vmatprep.subr.mxu0 0.0
        %1367 = vmatpush1.msra.mxu0 0.0
        %1368 = vmatprep.subr.mxu0 0.0
        %1369 = vmatpush1.msra.mxu0 0.0
        %1370 = vmatprep.subr.mxu0 0.0
        %1371 = vmatpush1.msra.mxu0 0.0
        %1372 = vmatprep.subr.mxu0 0.0
        %1373 = vmatpush1.msra.mxu0 0.0
        %1374 = vmatprep.subr.mxu0 0.0
        %1375 = vmatpush1.msra.mxu0 0.0
        %1376 = vmatprep.subr.mxu0 0.0
        %1377 = vmatpush1.msra.mxu0 0.0
        %1378 = vmatprep.subr.mxu0 0.0
        %1379 = vmatpush1.msra.mxu0 0.0
        %1380 = vmatprep.subr.mxu0 0.0
        %1381 = vmatpush1.msra.mxu0 0.0
        %1382 = vmatprep.subr.mxu0 0.0
        %1383 = vmatpush1.msra.mxu0 0.0
        %1384 = vmatprep.subr.mxu0 0.0
        %1385 = vmatpush1.msra.mxu0 0.0
        %1386 = vmatprep.subr.mxu0 0.0
        %v1387 = vand.u32 %v728, 4294901760
        %v1388 = vsub.f32 %v728, %v1387
        %v1389 = vand.u32 %v1388, 4294901760
        %v1390 = vsub.f32 %v1388, %v1389
        %v1391 = vand.u32 %v1390, 4294901760
        %1392 = vmatpush1.msra.mxu0 %v1391
        %1393 = vmatprep.subr.mxu0 0.0
        %v1394 = vand.u32 %v722, 4294901760
        %v1395 = vsub.f32 %v722, %v1394
        %v1396 = vand.u32 %v1395, 4294901760
        %v1397 = vsub.f32 %v1395, %v1396
        %v1398 = vand.u32 %v1397, 4294901760
        %1399 = vmatpush1.msra.mxu0 %v1398
        %1400 = vmatprep.subr.mxu0 0.0
        %1401 = vmatpush2.msra.mxu0 0.0
        %1402 = vmatprep.subr.mxu0 0.0
        %1403 = vmatpush2.msra.mxu0 0.0
        %1404 = vmatprep.subr.mxu0 0.0
        %1405 = vmatpush2.msra.mxu0 0.0
        %1406 = vmatprep.subr.mxu0 0.0
        %1407 = vmatpush2.msra.mxu0 0.0
        %1408 = vmatprep.subr.mxu0 0.0
        %1409 = vmatpush2.msra.mxu0 0.0
        %1410 = vmatprep.subr.mxu0 0.0
        %1411 = vmatpush2.msra.mxu0 0.0
        %1412 = vmatprep.subr.mxu0 0.0
        %1413 = vmatpush2.msra.mxu0 0.0
        %1414 = vmatprep.subr.mxu0 0.0
        %1415 = vmatpush2.msra.mxu0 0.0
        %1416 = vmatprep.subr.mxu0 0.0
        %1417 = vmatpush2.msra.mxu0 0.0
        %1418 = vmatprep.subr.mxu0 0.0
        %1419 = vmatpush2.msra.mxu0 0.0
        %1420 = vmatprep.subr.mxu0 0.0
        %1421 = vmatpush2.msra.mxu0 0.0
        %1422 = vmatprep.subr.mxu0 0.0
        %1423 = vmatpush2.msra.mxu0 0.0
        %1424 = vmatprep.subr.mxu0 0.0
        %1425 = vmatpush2.msra.mxu0 0.0
        %1426 = vmatprep.subr.mxu0 0.0
        %1427 = vmatpush2.msra.mxu0 0.0
        %1428 = vmatprep.subr.mxu0 0.0
        %1429 = vmatpush2.msra.mxu0 0.0
        %1430 = vmatprep.subr.mxu0 0.0
        %1431 = vmatpush2.msra.mxu0 0.0
        %1432 = vmatprep.mubr.f32.mxu0 0.0
        %v1433 = vand.u32 %v1240, 4294901760
        %1434 = vmatmul.mubr.f32.gmra.mxu0 %v1433
        %v1435 = vpop.f32.mrf.mxu0
        %v1436 = vadd.f32 %v1325, %v1435
        %v1437 = vpop.f32.mrf.mxu0
        %1438 = vmatprep.mubr.f32.mxu0 0.0
        %v1439 = vand.u32 %v1243, 4294901760
        %1440 = vmatmul.mubr.f32.gmra.mxu0 %v1439
        %v1441 = vpop.f32.mrf.mxu0
        %v1442 = vadd.f32 %v1335, %v1441
        %v1443 = vpop.f32.mrf.mxu0
        %1444 = vmatprep.mubr.f32.mxu0 0.0
        %v1445 = vand.u32 %v1246, 4294901760
        %1446 = vmatmul.mubr.f32.gmra.mxu0 %v1445
        %v1447 = vpop.f32.mrf.mxu0
        %v1448 = vadd.f32 %v1345, %v1447
        %v1449 = vpop.f32.mrf.mxu0
        %1450 = vmatprep.mubr.f32.mxu0 0.0
        %v1451 = vand.u32 %v1249, 4294901760
        %1452 = vmatmul.mubr.f32.gmra.mxu0 %v1451
        %v1453 = vpop.f32.mrf.mxu0
        %v1454 = vadd.f32 %v1355, %v1453
        %v1455 = vpop.f32.mrf.mxu0
        %1456 = vdwg.mxu0
        %1457 = vmatprep.subr.mxu0 0.0
        %1458 = vmatpush1.msra.mxu0 0.0
        %1459 = vmatprep.subr.mxu0 0.0
        %1460 = vmatpush1.msra.mxu0 0.0
        %1461 = vmatprep.subr.mxu0 0.0
        %1462 = vmatpush1.msra.mxu0 0.0
        %1463 = vmatprep.subr.mxu0 0.0
        %1464 = vmatpush1.msra.mxu0 0.0
        %1465 = vmatprep.subr.mxu0 0.0
        %1466 = vmatpush1.msra.mxu0 0.0
        %1467 = vmatprep.subr.mxu0 0.0
        %1468 = vmatpush1.msra.mxu0 0.0
        %1469 = vmatprep.subr.mxu0 0.0
        %1470 = vmatpush1.msra.mxu0 0.0
        %1471 = vmatprep.subr.mxu0 0.0
        %1472 = vmatpush1.msra.mxu0 0.0
        %1473 = vmatprep.subr.mxu0 0.0
        %1474 = vmatpush1.msra.mxu0 0.0
        %1475 = vmatprep.subr.mxu0 0.0
        %1476 = vmatpush1.msra.mxu0 0.0
        %1477 = vmatprep.subr.mxu0 0.0
        %1478 = vmatpush1.msra.mxu0 0.0
        %1479 = vmatprep.subr.mxu0 0.0
        %1480 = vmatpush1.msra.mxu0 0.0
        %1481 = vmatprep.subr.mxu0 0.0
        %1482 = vmatpush1.msra.mxu0 0.0
        %1483 = vmatprep.subr.mxu0 0.0
        %1484 = vmatpush1.msra.mxu0 0.0
        %1485 = vmatprep.subr.mxu0 0.0
        %v1486 = vand.u32 %v728, 4294901760
        %v1487 = vsub.f32 %v728, %v1486
        %1488 = vmatpush1.msra.mxu0 %v1487
        %1489 = vmatprep.subr.mxu0 0.0
        %v1490 = vand.u32 %v722, 4294901760
        %v1491 = vsub.f32 %v722, %v1490
        %1492 = vmatpush1.msra.mxu0 %v1491
        %1493 = vmatprep.subr.mxu0 0.0
        %1494 = vmatpush2.msra.mxu0 0.0
        %1495 = vmatprep.subr.mxu0 0.0
        %1496 = vmatpush2.msra.mxu0 0.0
        %1497 = vmatprep.subr.mxu0 0.0
        %1498 = vmatpush2.msra.mxu0 0.0
        %1499 = vmatprep.subr.mxu0 0.0
        %1500 = vmatpush2.msra.mxu0 0.0
        %1501 = vmatprep.subr.mxu0 0.0
        %1502 = vmatpush2.msra.mxu0 0.0
        %1503 = vmatprep.subr.mxu0 0.0
        %1504 = vmatpush2.msra.mxu0 0.0
        %1505 = vmatprep.subr.mxu0 0.0
        %1506 = vmatpush2.msra.mxu0 0.0
        %1507 = vmatprep.subr.mxu0 0.0
        %1508 = vmatpush2.msra.mxu0 0.0
        %1509 = vmatprep.subr.mxu0 0.0
        %1510 = vmatpush2.msra.mxu0 0.0
        %1511 = vmatprep.subr.mxu0 0.0
        %1512 = vmatpush2.msra.mxu0 0.0
        %1513 = vmatprep.subr.mxu0 0.0
        %1514 = vmatpush2.msra.mxu0 0.0
        %1515 = vmatprep.subr.mxu0 0.0
        %1516 = vmatpush2.msra.mxu0 0.0
        %1517 = vmatprep.subr.mxu0 0.0
        %1518 = vmatpush2.msra.mxu0 0.0
        %1519 = vmatprep.subr.mxu0 0.0
        %1520 = vmatpush2.msra.mxu0 0.0
        %1521 = vmatprep.subr.mxu0 0.0
        %1522 = vmatpush2.msra.mxu0 0.0
        %1523 = vmatprep.subr.mxu0 0.0
        %1524 = vmatpush2.msra.mxu0 0.0
        %1525 = vmatprep.mubr.f32.mxu0 0.0
        %v1526 = vand.u32 %v1240, 4294901760
        %v1527 = vsub.f32 %v1240, %v1526
        %1528 = vmatmul.mubr.f32.gmra.mxu0 %v1527
        %v1529 = vpop.f32.mrf.mxu0
        %v1530 = vadd.f32 %v1436, %v1529
        %v1531 = vpop.f32.mrf.mxu0
        %1532 = vmatprep.mubr.f32.mxu0 0.0
        %v1533 = vand.u32 %v1243, 4294901760
        %v1534 = vsub.f32 %v1243, %v1533
        %1535 = vmatmul.mubr.f32.gmra.mxu0 %v1534
        %v1536 = vpop.f32.mrf.mxu0
        %v1537 = vadd.f32 %v1442, %v1536
        %v1538 = vpop.f32.mrf.mxu0
        %1539 = vmatprep.mubr.f32.mxu0 0.0
        %v1540 = vand.u32 %v1246, 4294901760
        %v1541 = vsub.f32 %v1246, %v1540
        %1542 = vmatmul.mubr.f32.gmra.mxu0 %v1541
        %v1543 = vpop.f32.mrf.mxu0
        %v1544 = vadd.f32 %v1448, %v1543
        %v1545 = vpop.f32.mrf.mxu0
        %1546 = vmatprep.mubr.f32.mxu0 0.0
        %v1547 = vand.u32 %v1249, 4294901760
        %v1548 = vsub.f32 %v1249, %v1547
        %1549 = vmatmul.mubr.f32.gmra.mxu0 %v1548
        %v1550 = vpop.f32.mrf.mxu0
        %v1551 = vadd.f32 %v1454, %v1550
        %v1552 = vpop.f32.mrf.mxu0
        %1553 = vdwg.mxu0
        %1554 = vmatprep.subr.mxu0 0.0
        %1555 = vmatpush1.msra.mxu0 0.0
        %1556 = vmatprep.subr.mxu0 0.0
        %1557 = vmatpush1.msra.mxu0 0.0
        %1558 = vmatprep.subr.mxu0 0.0
        %1559 = vmatpush1.msra.mxu0 0.0
        %1560 = vmatprep.subr.mxu0 0.0
        %1561 = vmatpush1.msra.mxu0 0.0
        %1562 = vmatprep.subr.mxu0 0.0
        %1563 = vmatpush1.msra.mxu0 0.0
        %1564 = vmatprep.subr.mxu0 0.0
        %1565 = vmatpush1.msra.mxu0 0.0
        %1566 = vmatprep.subr.mxu0 0.0
        %1567 = vmatpush1.msra.mxu0 0.0
        %1568 = vmatprep.subr.mxu0 0.0
        %1569 = vmatpush1.msra.mxu0 0.0
        %1570 = vmatprep.subr.mxu0 0.0
        %1571 = vmatpush1.msra.mxu0 0.0
        %1572 = vmatprep.subr.mxu0 0.0
        %1573 = vmatpush1.msra.mxu0 0.0
        %1574 = vmatprep.subr.mxu0 0.0
        %1575 = vmatpush1.msra.mxu0 0.0
        %1576 = vmatprep.subr.mxu0 0.0
        %1577 = vmatpush1.msra.mxu0 0.0
        %1578 = vmatprep.subr.mxu0 0.0
        %1579 = vmatpush1.msra.mxu0 0.0
        %1580 = vmatprep.subr.mxu0 0.0
        %1581 = vmatpush1.msra.mxu0 0.0
        %1582 = vmatprep.subr.mxu0 0.0
        %v1583 = vand.u32 %v728, 4294901760
        %1584 = vmatpush1.msra.mxu0 %v1583
        %1585 = vmatprep.subr.mxu0 0.0
        %v1586 = vand.u32 %v722, 4294901760
        %1587 = vmatpush1.msra.mxu0 %v1586
        %1588 = vmatprep.subr.mxu0 0.0
        %1589 = vmatpush2.msra.mxu0 0.0
        %1590 = vmatprep.subr.mxu0 0.0
        %1591 = vmatpush2.msra.mxu0 0.0
        %1592 = vmatprep.subr.mxu0 0.0
        %1593 = vmatpush2.msra.mxu0 0.0
        %1594 = vmatprep.subr.mxu0 0.0
        %1595 = vmatpush2.msra.mxu0 0.0
        %1596 = vmatprep.subr.mxu0 0.0
        %1597 = vmatpush2.msra.mxu0 0.0
        %1598 = vmatprep.subr.mxu0 0.0
        %1599 = vmatpush2.msra.mxu0 0.0
        %1600 = vmatprep.subr.mxu0 0.0
        %1601 = vmatpush2.msra.mxu0 0.0
        %1602 = vmatprep.subr.mxu0 0.0
        %1603 = vmatpush2.msra.mxu0 0.0
        %1604 = vmatprep.subr.mxu0 0.0
        %1605 = vmatpush2.msra.mxu0 0.0
        %1606 = vmatprep.subr.mxu0 0.0
        %1607 = vmatpush2.msra.mxu0 0.0
        %1608 = vmatprep.subr.mxu0 0.0
        %1609 = vmatpush2.msra.mxu0 0.0
        %1610 = vmatprep.subr.mxu0 0.0
        %1611 = vmatpush2.msra.mxu0 0.0
        %1612 = vmatprep.subr.mxu0 0.0
        %1613 = vmatpush2.msra.mxu0 0.0
        %1614 = vmatprep.subr.mxu0 0.0
        %1615 = vmatpush2.msra.mxu0 0.0
        %1616 = vmatprep.subr.mxu0 0.0
        %1617 = vmatpush2.msra.mxu0 0.0
        %1618 = vmatprep.subr.mxu0 0.0
        %1619 = vmatpush2.msra.mxu0 0.0
        %1620 = vmatprep.mubr.f32.mxu0 0.0
        %v1621 = vand.u32 %v1240, 4294901760
        %v1622 = vsub.f32 %v1240, %v1621
        %v1623 = vand.u32 %v1622, 4294901760
        %1624 = vmatmul.mubr.f32.gmra.mxu0 %v1623
        %v1625 = vpop.f32.mrf.mxu0
        %v1626 = vadd.f32 %v1530, %v1625
        %v1627 = vpop.f32.mrf.mxu0
        %1628 = vmatprep.mubr.f32.mxu0 0.0
        %v1629 = vand.u32 %v1243, 4294901760
        %v1630 = vsub.f32 %v1243, %v1629
        %v1631 = vand.u32 %v1630, 4294901760
        %1632 = vmatmul.mubr.f32.gmra.mxu0 %v1631
        %v1633 = vpop.f32.mrf.mxu0
        %v1634 = vadd.f32 %v1537, %v1633
        %v1635 = vpop.f32.mrf.mxu0
        %1636 = vmatprep.mubr.f32.mxu0 0.0
        %v1637 = vand.u32 %v1246, 4294901760
        %v1638 = vsub.f32 %v1246, %v1637
        %v1639 = vand.u32 %v1638, 4294901760
        %1640 = vmatmul.mubr.f32.gmra.mxu0 %v1639
        %v1641 = vpop.f32.mrf.mxu0
        %v1642 = vadd.f32 %v1544, %v1641
        %v1643 = vpop.f32.mrf.mxu0
        %1644 = vmatprep.mubr.f32.mxu0 0.0
        %v1645 = vand.u32 %v1249, 4294901760
        %v1646 = vsub.f32 %v1249, %v1645
        %v1647 = vand.u32 %v1646, 4294901760
        %1648 = vmatmul.mubr.f32.gmra.mxu0 %v1647
        %v1649 = vpop.f32.mrf.mxu0
        %v1650 = vadd.f32 %v1551, %v1649
        %v1651 = vpop.f32.mrf.mxu0
        %1652 = vdwg.mxu0
        %1653 = vmatprep.subr.mxu0 0.0
        %1654 = vmatpush1.msra.mxu0 0.0
        %1655 = vmatprep.subr.mxu0 0.0
        %1656 = vmatpush1.msra.mxu0 0.0
        %1657 = vmatprep.subr.mxu0 0.0
        %1658 = vmatpush1.msra.mxu0 0.0
        %1659 = vmatprep.subr.mxu0 0.0
        %1660 = vmatpush1.msra.mxu0 0.0
        %1661 = vmatprep.subr.mxu0 0.0
        %1662 = vmatpush1.msra.mxu0 0.0
        %1663 = vmatprep.subr.mxu0 0.0
        %1664 = vmatpush1.msra.mxu0 0.0
        %1665 = vmatprep.subr.mxu0 0.0
        %1666 = vmatpush1.msra.mxu0 0.0
        %1667 = vmatprep.subr.mxu0 0.0
        %1668 = vmatpush1.msra.mxu0 0.0
        %1669 = vmatprep.subr.mxu0 0.0
        %1670 = vmatpush1.msra.mxu0 0.0
        %1671 = vmatprep.subr.mxu0 0.0
        %1672 = vmatpush1.msra.mxu0 0.0
        %1673 = vmatprep.subr.mxu0 0.0
        %1674 = vmatpush1.msra.mxu0 0.0
        %1675 = vmatprep.subr.mxu0 0.0
        %1676 = vmatpush1.msra.mxu0 0.0
        %1677 = vmatprep.subr.mxu0 0.0
        %1678 = vmatpush1.msra.mxu0 0.0
        %1679 = vmatprep.subr.mxu0 0.0
        %1680 = vmatpush1.msra.mxu0 0.0
        %1681 = vmatprep.subr.mxu0 0.0
        %v1682 = vand.u32 %v728, 4294901760
        %v1683 = vsub.f32 %v728, %v1682
        %v1684 = vand.u32 %v1683, 4294901760
        %1685 = vmatpush1.msra.mxu0 %v1684
        %1686 = vmatprep.subr.mxu0 0.0
        %v1687 = vand.u32 %v722, 4294901760
        %v1688 = vsub.f32 %v722, %v1687
        %v1689 = vand.u32 %v1688, 4294901760
        %1690 = vmatpush1.msra.mxu0 %v1689
        %1691 = vmatprep.subr.mxu0 0.0
        %1692 = vmatpush2.msra.mxu0 0.0
        %1693 = vmatprep.subr.mxu0 0.0
        %1694 = vmatpush2.msra.mxu0 0.0
        %1695 = vmatprep.subr.mxu0 0.0
        %1696 = vmatpush2.msra.mxu0 0.0
        %1697 = vmatprep.subr.mxu0 0.0
        %1698 = vmatpush2.msra.mxu0 0.0
        %1699 = vmatprep.subr.mxu0 0.0
        %1700 = vmatpush2.msra.mxu0 0.0
        %1701 = vmatprep.subr.mxu0 0.0
        %1702 = vmatpush2.msra.mxu0 0.0
        %1703 = vmatprep.subr.mxu0 0.0
        %1704 = vmatpush2.msra.mxu0 0.0
        %1705 = vmatprep.subr.mxu0 0.0
        %1706 = vmatpush2.msra.mxu0 0.0
        %1707 = vmatprep.subr.mxu0 0.0
        %1708 = vmatpush2.msra.mxu0 0.0
        %1709 = vmatprep.subr.mxu0 0.0
        %1710 = vmatpush2.msra.mxu0 0.0
        %1711 = vmatprep.subr.mxu0 0.0
        %1712 = vmatpush2.msra.mxu0 0.0
        %1713 = vmatprep.subr.mxu0 0.0
        %1714 = vmatpush2.msra.mxu0 0.0
        %1715 = vmatprep.subr.mxu0 0.0
        %1716 = vmatpush2.msra.mxu0 0.0
        %1717 = vmatprep.subr.mxu0 0.0
        %1718 = vmatpush2.msra.mxu0 0.0
        %1719 = vmatprep.subr.mxu0 0.0
        %1720 = vmatpush2.msra.mxu0 0.0
        %1721 = vmatprep.subr.mxu0 0.0
        %1722 = vmatpush2.msra.mxu0 0.0
        %1723 = vmatprep.mubr.f32.mxu0 0.0
        %v1724 = vand.u32 %v1240, 4294901760
        %1725 = vmatmul.mubr.f32.gmra.mxu0 %v1724
        %v1726 = vpop.f32.mrf.mxu0
        %v1727 = vadd.f32 %v1626, %v1726
        %v1728 = vpop.f32.mrf.mxu0
        %1729 = vmatprep.mubr.f32.mxu0 0.0
        %v1730 = vand.u32 %v1243, 4294901760
        %1731 = vmatmul.mubr.f32.gmra.mxu0 %v1730
        %v1732 = vpop.f32.mrf.mxu0
        %v1733 = vadd.f32 %v1634, %v1732
        %v1734 = vpop.f32.mrf.mxu0
        %1735 = vmatprep.mubr.f32.mxu0 0.0
        %v1736 = vand.u32 %v1246, 4294901760
        %1737 = vmatmul.mubr.f32.gmra.mxu0 %v1736
        %v1738 = vpop.f32.mrf.mxu0
        %v1739 = vadd.f32 %v1642, %v1738
        %v1740 = vpop.f32.mrf.mxu0
        %1741 = vmatprep.mubr.f32.mxu0 0.0
        %v1742 = vand.u32 %v1249, 4294901760
        %1743 = vmatmul.mubr.f32.gmra.mxu0 %v1742
        %v1744 = vpop.f32.mrf.mxu0
        %v1745 = vadd.f32 %v1650, %v1744
        %v1746 = vpop.f32.mrf.mxu0
        %1747 = vdwg.mxu0
        %1748 = vmatprep.subr.mxu0 0.0
        %1749 = vmatpush1.msra.mxu0 0.0
        %1750 = vmatprep.subr.mxu0 0.0
        %1751 = vmatpush1.msra.mxu0 0.0
        %1752 = vmatprep.subr.mxu0 0.0
        %1753 = vmatpush1.msra.mxu0 0.0
        %1754 = vmatprep.subr.mxu0 0.0
        %1755 = vmatpush1.msra.mxu0 0.0
        %1756 = vmatprep.subr.mxu0 0.0
        %1757 = vmatpush1.msra.mxu0 0.0
        %1758 = vmatprep.subr.mxu0 0.0
        %1759 = vmatpush1.msra.mxu0 0.0
        %1760 = vmatprep.subr.mxu0 0.0
        %1761 = vmatpush1.msra.mxu0 0.0
        %1762 = vmatprep.subr.mxu0 0.0
        %1763 = vmatpush1.msra.mxu0 0.0
        %1764 = vmatprep.subr.mxu0 0.0
        %1765 = vmatpush1.msra.mxu0 0.0
        %1766 = vmatprep.subr.mxu0 0.0
        %1767 = vmatpush1.msra.mxu0 0.0
        %1768 = vmatprep.subr.mxu0 0.0
        %1769 = vmatpush1.msra.mxu0 0.0
        %1770 = vmatprep.subr.mxu0 0.0
        %1771 = vmatpush1.msra.mxu0 0.0
        %1772 = vmatprep.subr.mxu0 0.0
        %1773 = vmatpush1.msra.mxu0 0.0
        %1774 = vmatprep.subr.mxu0 0.0
        %1775 = vmatpush1.msra.mxu0 0.0
        %1776 = vmatprep.subr.mxu0 0.0
        %v1777 = vand.u32 %v728, 4294901760
        %1778 = vmatpush1.msra.mxu0 %v1777
        %1779 = vmatprep.subr.mxu0 0.0
        %v1780 = vand.u32 %v722, 4294901760
        %1781 = vmatpush1.msra.mxu0 %v1780
        %1782 = vmatprep.subr.mxu0 0.0
        %1783 = vmatpush2.msra.mxu0 0.0
        %1784 = vmatprep.subr.mxu0 0.0
        %1785 = vmatpush2.msra.mxu0 0.0
        %1786 = vmatprep.subr.mxu0 0.0
        %1787 = vmatpush2.msra.mxu0 0.0
        %1788 = vmatprep.subr.mxu0 0.0
        %1789 = vmatpush2.msra.mxu0 0.0
        %1790 = vmatprep.subr.mxu0 0.0
        %1791 = vmatpush2.msra.mxu0 0.0
        %1792 = vmatprep.subr.mxu0 0.0
        %1793 = vmatpush2.msra.mxu0 0.0
        %1794 = vmatprep.subr.mxu0 0.0
        %1795 = vmatpush2.msra.mxu0 0.0
        %1796 = vmatprep.subr.mxu0 0.0
        %1797 = vmatpush2.msra.mxu0 0.0
        %1798 = vmatprep.subr.mxu0 0.0
        %1799 = vmatpush2.msra.mxu0 0.0
        %1800 = vmatprep.subr.mxu0 0.0
        %1801 = vmatpush2.msra.mxu0 0.0
        %1802 = vmatprep.subr.mxu0 0.0
        %1803 = vmatpush2.msra.mxu0 0.0
        %1804 = vmatprep.subr.mxu0 0.0
        %1805 = vmatpush2.msra.mxu0 0.0
        %1806 = vmatprep.subr.mxu0 0.0
        %1807 = vmatpush2.msra.mxu0 0.0
        %1808 = vmatprep.subr.mxu0 0.0
        %1809 = vmatpush2.msra.mxu0 0.0
        %1810 = vmatprep.subr.mxu0 0.0
        %1811 = vmatpush2.msra.mxu0 0.0
        %1812 = vmatprep.subr.mxu0 0.0
        %1813 = vmatpush2.msra.mxu0 0.0
        %1814 = vmatprep.mubr.f32.mxu0 0.0
        %v1815 = vand.u32 %v1240, 4294901760
        %1816 = vmatmul.mubr.f32.gmra.mxu0 %v1815
        %v1817 = vpop.f32.mrf.mxu0
        %v1818 = vadd.f32 %v1727, %v1817
        %v1819 = vpop.f32.mrf.mxu0
        %1820 = vmatprep.mubr.f32.mxu0 0.0
        %v1821 = vand.u32 %v1243, 4294901760
        %1822 = vmatmul.mubr.f32.gmra.mxu0 %v1821
        %v1823 = vpop.f32.mrf.mxu0
        %v1824 = vadd.f32 %v1733, %v1823
        %v1825 = vpop.f32.mrf.mxu0
        %1826 = vmatprep.mubr.f32.mxu0 0.0
        %v1827 = vand.u32 %v1246, 4294901760
        %1828 = vmatmul.mubr.f32.gmra.mxu0 %v1827
        %v1829 = vpop.f32.mrf.mxu0
        %v1830 = vadd.f32 %v1739, %v1829
        %v1831 = vpop.f32.mrf.mxu0
        %1832 = vmatprep.mubr.f32.mxu0 0.0
        %v1833 = vand.u32 %v1249, 4294901760
        %1834 = vmatmul.mubr.f32.gmra.mxu0 %v1833
        %v1835 = vpop.f32.mrf.mxu0
        %v1836 = vadd.f32 %v1745, %v1835
        %v1837 = vpop.f32.mrf.mxu0
        %1838 = vdwg.mxu0
        %1839 = vmatprep.subr.mxu0 0.0
        %1840 = vmatpush1.msra.mxu0 0.0
        %1841 = vmatprep.subr.mxu0 0.0
        %1842 = vmatpush1.msra.mxu0 0.0
        %1843 = vmatprep.subr.mxu0 0.0
        %1844 = vmatpush1.msra.mxu0 0.0
        %1845 = vmatprep.subr.mxu0 0.0
        %1846 = vmatpush1.msra.mxu0 0.0
        %1847 = vmatprep.subr.mxu0 0.0
        %1848 = vmatpush1.msra.mxu0 0.0
        %1849 = vmatprep.subr.mxu0 0.0
        %1850 = vmatpush1.msra.mxu0 0.0
        %1851 = vmatprep.subr.mxu0 0.0
        %1852 = vmatpush1.msra.mxu0 0.0
        %1853 = vmatprep.subr.mxu0 0.0
        %1854 = vmatpush1.msra.mxu0 0.0
        %1855 = vmatprep.subr.mxu0 0.0
        %1856 = vmatpush1.msra.mxu0 0.0
        %1857 = vmatprep.subr.mxu0 0.0
        %1858 = vmatpush1.msra.mxu0 0.0
        %1859 = vmatprep.subr.mxu0 0.0
        %1860 = vmatpush1.msra.mxu0 0.0
        %1861 = vmatprep.subr.mxu0 0.0
        %1862 = vmatpush1.msra.mxu0 0.0
        %1863 = vmatprep.subr.mxu0 0.0
        %1864 = vmatpush1.msra.mxu0 0.0
        %1865 = vmatprep.subr.mxu0 0.0
        %1866 = vmatpush1.msra.mxu0 0.0
        %1867 = vmatprep.subr.mxu0 0.0
        %v1868 = vand.u32 %v1236, 4294901760
        %1869 = vmatpush1.msra.mxu0 %v1868
        %1870 = vmatprep.subr.mxu0 0.0
        %v1871 = vand.u32 %v1230, 4294901760
        %1872 = vmatpush1.msra.mxu0 %v1871
        %1873 = vmatprep.subr.mxu0 0.0
        %1874 = vmatpush2.msra.mxu0 0.0
        %1875 = vmatprep.subr.mxu0 0.0
        %1876 = vmatpush2.msra.mxu0 0.0
        %1877 = vmatprep.subr.mxu0 0.0
        %1878 = vmatpush2.msra.mxu0 0.0
        %1879 = vmatprep.subr.mxu0 0.0
        %1880 = vmatpush2.msra.mxu0 0.0
        %1881 = vmatprep.subr.mxu0 0.0
        %1882 = vmatpush2.msra.mxu0 0.0
        %1883 = vmatprep.subr.mxu0 0.0
        %1884 = vmatpush2.msra.mxu0 0.0
        %1885 = vmatprep.subr.mxu0 0.0
        %1886 = vmatpush2.msra.mxu0 0.0
        %1887 = vmatprep.subr.mxu0 0.0
        %1888 = vmatpush2.msra.mxu0 0.0
        %1889 = vmatprep.subr.mxu0 0.0
        %1890 = vmatpush2.msra.mxu0 0.0
        %1891 = vmatprep.subr.mxu0 0.0
        %1892 = vmatpush2.msra.mxu0 0.0
        %1893 = vmatprep.subr.mxu0 0.0
        %1894 = vmatpush2.msra.mxu0 0.0
        %1895 = vmatprep.subr.mxu0 0.0
        %1896 = vmatpush2.msra.mxu0 0.0
        %1897 = vmatprep.subr.mxu0 0.0
        %1898 = vmatpush2.msra.mxu0 0.0
        %1899 = vmatprep.subr.mxu0 0.0
        %1900 = vmatpush2.msra.mxu0 0.0
        %1901 = vmatprep.subr.mxu0 0.0
        %1902 = vmatpush2.msra.mxu0 0.0
        %1903 = vmatprep.subr.mxu0 0.0
        %1904 = vmatpush2.msra.mxu0 0.0
        %1905 = vmatprep.mubr.f32.mxu0 0.0
        %v1906 = vand.u32 %v1240, 4294901760
        %v1907 = vsub.f32 %v1240, %v1906
        %v1908 = vand.u32 %v1907, 4294901760
        %v1909 = vsub.f32 %v1907, %v1908
        %v1910 = vand.u32 %v1909, 4294901760
        %1911 = vmatmul.mubr.f32.gmra.mxu0 %v1910
        %v1912 = vpop.f32.mrf.mxu0
        %v1913 = vadd.f32 0.0, %v1912
        %v1914 = vpop.f32.mrf.mxu0
        %1915 = vmatprep.mubr.f32.mxu0 0.0
        %v1916 = vand.u32 %v1243, 4294901760
        %v1917 = vsub.f32 %v1243, %v1916
        %v1918 = vand.u32 %v1917, 4294901760
        %v1919 = vsub.f32 %v1917, %v1918
        %v1920 = vand.u32 %v1919, 4294901760
        %1921 = vmatmul.mubr.f32.gmra.mxu0 %v1920
        %v1922 = vpop.f32.mrf.mxu0
        %v1923 = vadd.f32 0.0, %v1922
        %v1924 = vpop.f32.mrf.mxu0
        %1925 = vmatprep.mubr.f32.mxu0 0.0
        %v1926 = vand.u32 %v1246, 4294901760
        %v1927 = vsub.f32 %v1246, %v1926
        %v1928 = vand.u32 %v1927, 4294901760
        %v1929 = vsub.f32 %v1927, %v1928
        %v1930 = vand.u32 %v1929, 4294901760
        %1931 = vmatmul.mubr.f32.gmra.mxu0 %v1930
        %v1932 = vpop.f32.mrf.mxu0
        %v1933 = vadd.f32 0.0, %v1932
        %v1934 = vpop.f32.mrf.mxu0
        %1935 = vmatprep.mubr.f32.mxu0 0.0
        %v1936 = vand.u32 %v1249, 4294901760
        %v1937 = vsub.f32 %v1249, %v1936
        %v1938 = vand.u32 %v1937, 4294901760
        %v1939 = vsub.f32 %v1937, %v1938
        %v1940 = vand.u32 %v1939, 4294901760
        %1941 = vmatmul.mubr.f32.gmra.mxu0 %v1940
        %v1942 = vpop.f32.mrf.mxu0
        %v1943 = vadd.f32 0.0, %v1942
        %v1944 = vpop.f32.mrf.mxu0
        %1945 = vdwg.mxu0
        %1946 = vmatprep.subr.mxu0 0.0
        %1947 = vmatpush1.msra.mxu0 0.0
        %1948 = vmatprep.subr.mxu0 0.0
        %1949 = vmatpush1.msra.mxu0 0.0
        %1950 = vmatprep.subr.mxu0 0.0
        %1951 = vmatpush1.msra.mxu0 0.0
        %1952 = vmatprep.subr.mxu0 0.0
        %1953 = vmatpush1.msra.mxu0 0.0
        %1954 = vmatprep.subr.mxu0 0.0
        %1955 = vmatpush1.msra.mxu0 0.0
        %1956 = vmatprep.subr.mxu0 0.0
        %1957 = vmatpush1.msra.mxu0 0.0
        %1958 = vmatprep.subr.mxu0 0.0
        %1959 = vmatpush1.msra.mxu0 0.0
        %1960 = vmatprep.subr.mxu0 0.0
        %1961 = vmatpush1.msra.mxu0 0.0
        %1962 = vmatprep.subr.mxu0 0.0
        %1963 = vmatpush1.msra.mxu0 0.0
        %1964 = vmatprep.subr.mxu0 0.0
        %1965 = vmatpush1.msra.mxu0 0.0
        %1966 = vmatprep.subr.mxu0 0.0
        %1967 = vmatpush1.msra.mxu0 0.0
        %1968 = vmatprep.subr.mxu0 0.0
        %1969 = vmatpush1.msra.mxu0 0.0
        %1970 = vmatprep.subr.mxu0 0.0
        %1971 = vmatpush1.msra.mxu0 0.0
        %1972 = vmatprep.subr.mxu0 0.0
        %1973 = vmatpush1.msra.mxu0 0.0
        %1974 = vmatprep.subr.mxu0 0.0
        %v1975 = vand.u32 %v1236, 4294901760
        %v1976 = vsub.f32 %v1236, %v1975
        %v1977 = vand.u32 %v1976, 4294901760
        %v1978 = vsub.f32 %v1976, %v1977
        %v1979 = vand.u32 %v1978, 4294901760
        %1980 = vmatpush1.msra.mxu0 %v1979
        %1981 = vmatprep.subr.mxu0 0.0
        %v1982 = vand.u32 %v1230, 4294901760
        %v1983 = vsub.f32 %v1230, %v1982
        %v1984 = vand.u32 %v1983, 4294901760
        %v1985 = vsub.f32 %v1983, %v1984
        %v1986 = vand.u32 %v1985, 4294901760
        %1987 = vmatpush1.msra.mxu0 %v1986
        %1988 = vmatprep.subr.mxu0 0.0
        %1989 = vmatpush2.msra.mxu0 0.0
        %1990 = vmatprep.subr.mxu0 0.0
        %1991 = vmatpush2.msra.mxu0 0.0
        %1992 = vmatprep.subr.mxu0 0.0
        %1993 = vmatpush2.msra.mxu0 0.0
        %1994 = vmatprep.subr.mxu0 0.0
        %1995 = vmatpush2.msra.mxu0 0.0
        %1996 = vmatprep.subr.mxu0 0.0
        %1997 = vmatpush2.msra.mxu0 0.0
        %1998 = vmatprep.subr.mxu0 0.0
        %1999 = vmatpush2.msra.mxu0 0.0
        %2000 = vmatprep.subr.mxu0 0.0
        %2001 = vmatpush2.msra.mxu0 0.0
        %2002 = vmatprep.subr.mxu0 0.0
        %2003 = vmatpush2.msra.mxu0 0.0
        %2004 = vmatprep.subr.mxu0 0.0
        %2005 = vmatpush2.msra.mxu0 0.0
        %2006 = vmatprep.subr.mxu0 0.0
        %2007 = vmatpush2.msra.mxu0 0.0
        %2008 = vmatprep.subr.mxu0 0.0
        %2009 = vmatpush2.msra.mxu0 0.0
        %2010 = vmatprep.subr.mxu0 0.0
        %2011 = vmatpush2.msra.mxu0 0.0
        %2012 = vmatprep.subr.mxu0 0.0
        %2013 = vmatpush2.msra.mxu0 0.0
        %2014 = vmatprep.subr.mxu0 0.0
        %2015 = vmatpush2.msra.mxu0 0.0
        %2016 = vmatprep.subr.mxu0 0.0
        %2017 = vmatpush2.msra.mxu0 0.0
        %2018 = vmatprep.subr.mxu0 0.0
        %2019 = vmatpush2.msra.mxu0 0.0
        %2020 = vmatprep.mubr.f32.mxu0 0.0
        %v2021 = vand.u32 %v1240, 4294901760
        %2022 = vmatmul.mubr.f32.gmra.mxu0 %v2021
        %v2023 = vpop.f32.mrf.mxu0
        %v2024 = vadd.f32 %v1913, %v2023
        %v2025 = vpop.f32.mrf.mxu0
        %2026 = vmatprep.mubr.f32.mxu0 0.0
        %v2027 = vand.u32 %v1243, 4294901760
        %2028 = vmatmul.mubr.f32.gmra.mxu0 %v2027
        %v2029 = vpop.f32.mrf.mxu0
        %v2030 = vadd.f32 %v1923, %v2029
        %v2031 = vpop.f32.mrf.mxu0
        %2032 = vmatprep.mubr.f32.mxu0 0.0
        %v2033 = vand.u32 %v1246, 4294901760
        %2034 = vmatmul.mubr.f32.gmra.mxu0 %v2033
        %v2035 = vpop.f32.mrf.mxu0
        %v2036 = vadd.f32 %v1933, %v2035
        %v2037 = vpop.f32.mrf.mxu0
        %2038 = vmatprep.mubr.f32.mxu0 0.0
        %v2039 = vand.u32 %v1249, 4294901760
        %2040 = vmatmul.mubr.f32.gmra.mxu0 %v2039
        %v2041 = vpop.f32.mrf.mxu0
        %v2042 = vadd.f32 %v1943, %v2041
        %v2043 = vpop.f32.mrf.mxu0
        %2044 = vdwg.mxu0
        %2045 = vmatprep.subr.mxu0 0.0
        %2046 = vmatpush1.msra.mxu0 0.0
        %2047 = vmatprep.subr.mxu0 0.0
        %2048 = vmatpush1.msra.mxu0 0.0
        %2049 = vmatprep.subr.mxu0 0.0
        %2050 = vmatpush1.msra.mxu0 0.0
        %2051 = vmatprep.subr.mxu0 0.0
        %2052 = vmatpush1.msra.mxu0 0.0
        %2053 = vmatprep.subr.mxu0 0.0
        %2054 = vmatpush1.msra.mxu0 0.0
        %2055 = vmatprep.subr.mxu0 0.0
        %2056 = vmatpush1.msra.mxu0 0.0
        %2057 = vmatprep.subr.mxu0 0.0
        %2058 = vmatpush1.msra.mxu0 0.0
        %2059 = vmatprep.subr.mxu0 0.0
        %2060 = vmatpush1.msra.mxu0 0.0
        %2061 = vmatprep.subr.mxu0 0.0
        %2062 = vmatpush1.msra.mxu0 0.0
        %2063 = vmatprep.subr.mxu0 0.0
        %2064 = vmatpush1.msra.mxu0 0.0
        %2065 = vmatprep.subr.mxu0 0.0
        %2066 = vmatpush1.msra.mxu0 0.0
        %2067 = vmatprep.subr.mxu0 0.0
        %2068 = vmatpush1.msra.mxu0 0.0
        %2069 = vmatprep.subr.mxu0 0.0
        %2070 = vmatpush1.msra.mxu0 0.0
        %2071 = vmatprep.subr.mxu0 0.0
        %2072 = vmatpush1.msra.mxu0 0.0
        %2073 = vmatprep.subr.mxu0 0.0
        %v2074 = vand.u32 %v1236, 4294901760
        %v2075 = vsub.f32 %v1236, %v2074
        %2076 = vmatpush1.msra.mxu0 %v2075
        %2077 = vmatprep.subr.mxu0 0.0
        %v2078 = vand.u32 %v1230, 4294901760
        %v2079 = vsub.f32 %v1230, %v2078
        %2080 = vmatpush1.msra.mxu0 %v2079
        %2081 = vmatprep.subr.mxu0 0.0
        %2082 = vmatpush2.msra.mxu0 0.0
        %2083 = vmatprep.subr.mxu0 0.0
        %2084 = vmatpush2.msra.mxu0 0.0
        %2085 = vmatprep.subr.mxu0 0.0
        %2086 = vmatpush2.msra.mxu0 0.0
        %2087 = vmatprep.subr.mxu0 0.0
        %2088 = vmatpush2.msra.mxu0 0.0
        %2089 = vmatprep.subr.mxu0 0.0
        %2090 = vmatpush2.msra.mxu0 0.0
        %2091 = vmatprep.subr.mxu0 0.0
        %2092 = vmatpush2.msra.mxu0 0.0
        %2093 = vmatprep.subr.mxu0 0.0
        %2094 = vmatpush2.msra.mxu0 0.0
        %2095 = vmatprep.subr.mxu0 0.0
        %2096 = vmatpush2.msra.mxu0 0.0
        %2097 = vmatprep.subr.mxu0 0.0
        %2098 = vmatpush2.msra.mxu0 0.0
        %2099 = vmatprep.subr.mxu0 0.0
        %2100 = vmatpush2.msra.mxu0 0.0
        %2101 = vmatprep.subr.mxu0 0.0
        %2102 = vmatpush2.msra.mxu0 0.0
        %2103 = vmatprep.subr.mxu0 0.0
        %2104 = vmatpush2.msra.mxu0 0.0
        %2105 = vmatprep.subr.mxu0 0.0
        %2106 = vmatpush2.msra.mxu0 0.0
        %2107 = vmatprep.subr.mxu0 0.0
        %2108 = vmatpush2.msra.mxu0 0.0
        %2109 = vmatprep.subr.mxu0 0.0
        %2110 = vmatpush2.msra.mxu0 0.0
        %2111 = vmatprep.subr.mxu0 0.0
        %2112 = vmatpush2.msra.mxu0 0.0
        %2113 = vmatprep.mubr.f32.mxu0 0.0
        %v2114 = vand.u32 %v1240, 4294901760
        %v2115 = vsub.f32 %v1240, %v2114
        %2116 = vmatmul.mubr.f32.gmra.mxu0 %v2115
        %v2117 = vpop.f32.mrf.mxu0
        %v2118 = vadd.f32 %v2024, %v2117
        %v2119 = vpop.f32.mrf.mxu0
        %2120 = vmatprep.mubr.f32.mxu0 0.0
        %v2121 = vand.u32 %v1243, 4294901760
        %v2122 = vsub.f32 %v1243, %v2121
        %2123 = vmatmul.mubr.f32.gmra.mxu0 %v2122
        %v2124 = vpop.f32.mrf.mxu0
        %v2125 = vadd.f32 %v2030, %v2124
        %v2126 = vpop.f32.mrf.mxu0
        %2127 = vmatprep.mubr.f32.mxu0 0.0
        %v2128 = vand.u32 %v1246, 4294901760
        %v2129 = vsub.f32 %v1246, %v2128
        %2130 = vmatmul.mubr.f32.gmra.mxu0 %v2129
        %v2131 = vpop.f32.mrf.mxu0
        %v2132 = vadd.f32 %v2036, %v2131
        %v2133 = vpop.f32.mrf.mxu0
        %2134 = vmatprep.mubr.f32.mxu0 0.0
        %v2135 = vand.u32 %v1249, 4294901760
        %v2136 = vsub.f32 %v1249, %v2135
        %2137 = vmatmul.mubr.f32.gmra.mxu0 %v2136
        %v2138 = vpop.f32.mrf.mxu0
        %v2139 = vadd.f32 %v2042, %v2138
        %v2140 = vpop.f32.mrf.mxu0
        %2141 = vdwg.mxu0
        %2142 = vmatprep.subr.mxu0 0.0
        %2143 = vmatpush1.msra.mxu0 0.0
        %2144 = vmatprep.subr.mxu0 0.0
        %2145 = vmatpush1.msra.mxu0 0.0
        %2146 = vmatprep.subr.mxu0 0.0
        %2147 = vmatpush1.msra.mxu0 0.0
        %2148 = vmatprep.subr.mxu0 0.0
        %2149 = vmatpush1.msra.mxu0 0.0
        %2150 = vmatprep.subr.mxu0 0.0
        %2151 = vmatpush1.msra.mxu0 0.0
        %2152 = vmatprep.subr.mxu0 0.0
        %2153 = vmatpush1.msra.mxu0 0.0
        %2154 = vmatprep.subr.mxu0 0.0
        %2155 = vmatpush1.msra.mxu0 0.0
        %2156 = vmatprep.subr.mxu0 0.0
        %2157 = vmatpush1.msra.mxu0 0.0
        %2158 = vmatprep.subr.mxu0 0.0
        %2159 = vmatpush1.msra.mxu0 0.0
        %2160 = vmatprep.subr.mxu0 0.0
        %2161 = vmatpush1.msra.mxu0 0.0
        %2162 = vmatprep.subr.mxu0 0.0
        %2163 = vmatpush1.msra.mxu0 0.0
        %2164 = vmatprep.subr.mxu0 0.0
        %2165 = vmatpush1.msra.mxu0 0.0
        %2166 = vmatprep.subr.mxu0 0.0
        %2167 = vmatpush1.msra.mxu0 0.0
        %2168 = vmatprep.subr.mxu0 0.0
        %2169 = vmatpush1.msra.mxu0 0.0
        %2170 = vmatprep.subr.mxu0 0.0
        %v2171 = vand.u32 %v1236, 4294901760
        %2172 = vmatpush1.msra.mxu0 %v2171
        %2173 = vmatprep.subr.mxu0 0.0
        %v2174 = vand.u32 %v1230, 4294901760
        %2175 = vmatpush1.msra.mxu0 %v2174
        %2176 = vmatprep.subr.mxu0 0.0
        %2177 = vmatpush2.msra.mxu0 0.0
        %2178 = vmatprep.subr.mxu0 0.0
        %2179 = vmatpush2.msra.mxu0 0.0
        %2180 = vmatprep.subr.mxu0 0.0
        %2181 = vmatpush2.msra.mxu0 0.0
        %2182 = vmatprep.subr.mxu0 0.0
        %2183 = vmatpush2.msra.mxu0 0.0
        %2184 = vmatprep.subr.mxu0 0.0
        %2185 = vmatpush2.msra.mxu0 0.0
        %2186 = vmatprep.subr.mxu0 0.0
        %2187 = vmatpush2.msra.mxu0 0.0
        %2188 = vmatprep.subr.mxu0 0.0
        %2189 = vmatpush2.msra.mxu0 0.0
        %2190 = vmatprep.subr.mxu0 0.0
        %2191 = vmatpush2.msra.mxu0 0.0
        %2192 = vmatprep.subr.mxu0 0.0
        %2193 = vmatpush2.msra.mxu0 0.0
        %2194 = vmatprep.subr.mxu0 0.0
        %2195 = vmatpush2.msra.mxu0 0.0
        %2196 = vmatprep.subr.mxu0 0.0
        %2197 = vmatpush2.msra.mxu0 0.0
        %2198 = vmatprep.subr.mxu0 0.0
        %2199 = vmatpush2.msra.mxu0 0.0
        %2200 = vmatprep.subr.mxu0 0.0
        %2201 = vmatpush2.msra.mxu0 0.0
        %2202 = vmatprep.subr.mxu0 0.0
        %2203 = vmatpush2.msra.mxu0 0.0
        %2204 = vmatprep.subr.mxu0 0.0
        %2205 = vmatpush2.msra.mxu0 0.0
        %2206 = vmatprep.subr.mxu0 0.0
        %2207 = vmatpush2.msra.mxu0 0.0
        %2208 = vmatprep.mubr.f32.mxu0 0.0
        %v2209 = vand.u32 %v1240, 4294901760
        %v2210 = vsub.f32 %v1240, %v2209
        %v2211 = vand.u32 %v2210, 4294901760
        %2212 = vmatmul.mubr.f32.gmra.mxu0 %v2211
        %v2213 = vpop.f32.mrf.mxu0
        %v2214 = vadd.f32 %v2118, %v2213
        %v2215 = vpop.f32.mrf.mxu0
        %2216 = vmatprep.mubr.f32.mxu0 0.0
        %v2217 = vand.u32 %v1243, 4294901760
        %v2218 = vsub.f32 %v1243, %v2217
        %v2219 = vand.u32 %v2218, 4294901760
        %2220 = vmatmul.mubr.f32.gmra.mxu0 %v2219
        %v2221 = vpop.f32.mrf.mxu0
        %v2222 = vadd.f32 %v2125, %v2221
        %v2223 = vpop.f32.mrf.mxu0
        %2224 = vmatprep.mubr.f32.mxu0 0.0
        %v2225 = vand.u32 %v1246, 4294901760
        %v2226 = vsub.f32 %v1246, %v2225
        %v2227 = vand.u32 %v2226, 4294901760
        %2228 = vmatmul.mubr.f32.gmra.mxu0 %v2227
        %v2229 = vpop.f32.mrf.mxu0
        %v2230 = vadd.f32 %v2132, %v2229
        %v2231 = vpop.f32.mrf.mxu0
        %2232 = vmatprep.mubr.f32.mxu0 0.0
        %v2233 = vand.u32 %v1249, 4294901760
        %v2234 = vsub.f32 %v1249, %v2233
        %v2235 = vand.u32 %v2234, 4294901760
        %2236 = vmatmul.mubr.f32.gmra.mxu0 %v2235
        %v2237 = vpop.f32.mrf.mxu0
        %v2238 = vadd.f32 %v2139, %v2237
        %v2239 = vpop.f32.mrf.mxu0
        %2240 = vdwg.mxu0
        %2241 = vmatprep.subr.mxu0 0.0
        %2242 = vmatpush1.msra.mxu0 0.0
        %2243 = vmatprep.subr.mxu0 0.0
        %2244 = vmatpush1.msra.mxu0 0.0
        %2245 = vmatprep.subr.mxu0 0.0
        %2246 = vmatpush1.msra.mxu0 0.0
        %2247 = vmatprep.subr.mxu0 0.0
        %2248 = vmatpush1.msra.mxu0 0.0
        %2249 = vmatprep.subr.mxu0 0.0
        %2250 = vmatpush1.msra.mxu0 0.0
        %2251 = vmatprep.subr.mxu0 0.0
        %2252 = vmatpush1.msra.mxu0 0.0
        %2253 = vmatprep.subr.mxu0 0.0
        %2254 = vmatpush1.msra.mxu0 0.0
        %2255 = vmatprep.subr.mxu0 0.0
        %2256 = vmatpush1.msra.mxu0 0.0
        %2257 = vmatprep.subr.mxu0 0.0
        %2258 = vmatpush1.msra.mxu0 0.0
        %2259 = vmatprep.subr.mxu0 0.0
        %2260 = vmatpush1.msra.mxu0 0.0
        %2261 = vmatprep.subr.mxu0 0.0
        %2262 = vmatpush1.msra.mxu0 0.0
        %2263 = vmatprep.subr.mxu0 0.0
        %2264 = vmatpush1.msra.mxu0 0.0
        %2265 = vmatprep.subr.mxu0 0.0
        %2266 = vmatpush1.msra.mxu0 0.0
        %2267 = vmatprep.subr.mxu0 0.0
        %2268 = vmatpush1.msra.mxu0 0.0
        %2269 = vmatprep.subr.mxu0 0.0
        %v2270 = vand.u32 %v1236, 4294901760
        %v2271 = vsub.f32 %v1236, %v2270
        %v2272 = vand.u32 %v2271, 4294901760
        %2273 = vmatpush1.msra.mxu0 %v2272
        %2274 = vmatprep.subr.mxu0 0.0
        %v2275 = vand.u32 %v1230, 4294901760
        %v2276 = vsub.f32 %v1230, %v2275
        %v2277 = vand.u32 %v2276, 4294901760
        %2278 = vmatpush1.msra.mxu0 %v2277
        %2279 = vmatprep.subr.mxu0 0.0
        %2280 = vmatpush2.msra.mxu0 0.0
        %2281 = vmatprep.subr.mxu0 0.0
        %2282 = vmatpush2.msra.mxu0 0.0
        %2283 = vmatprep.subr.mxu0 0.0
        %2284 = vmatpush2.msra.mxu0 0.0
        %2285 = vmatprep.subr.mxu0 0.0
        %2286 = vmatpush2.msra.mxu0 0.0
        %2287 = vmatprep.subr.mxu0 0.0
        %2288 = vmatpush2.msra.mxu0 0.0
        %2289 = vmatprep.subr.mxu0 0.0
        %2290 = vmatpush2.msra.mxu0 0.0
        %2291 = vmatprep.subr.mxu0 0.0
        %2292 = vmatpush2.msra.mxu0 0.0
        %2293 = vmatprep.subr.mxu0 0.0
        %2294 = vmatpush2.msra.mxu0 0.0
        %2295 = vmatprep.subr.mxu0 0.0
        %2296 = vmatpush2.msra.mxu0 0.0
        %2297 = vmatprep.subr.mxu0 0.0
        %2298 = vmatpush2.msra.mxu0 0.0
        %2299 = vmatprep.subr.mxu0 0.0
        %2300 = vmatpush2.msra.mxu0 0.0
        %2301 = vmatprep.subr.mxu0 0.0
        %2302 = vmatpush2.msra.mxu0 0.0
        %2303 = vmatprep.subr.mxu0 0.0
        %2304 = vmatpush2.msra.mxu0 0.0
        %2305 = vmatprep.subr.mxu0 0.0
        %2306 = vmatpush2.msra.mxu0 0.0
        %2307 = vmatprep.subr.mxu0 0.0
        %2308 = vmatpush2.msra.mxu0 0.0
        %2309 = vmatprep.subr.mxu0 0.0
        %2310 = vmatpush2.msra.mxu0 0.0
        %2311 = vmatprep.mubr.f32.mxu0 0.0
        %v2312 = vand.u32 %v1240, 4294901760
        %2313 = vmatmul.mubr.f32.gmra.mxu0 %v2312
        %v2314 = vpop.f32.mrf.mxu0
        %v2315 = vadd.f32 %v2214, %v2314
        %v2316 = vpop.f32.mrf.mxu0
        %2317 = vmatprep.mubr.f32.mxu0 0.0
        %v2318 = vand.u32 %v1243, 4294901760
        %2319 = vmatmul.mubr.f32.gmra.mxu0 %v2318
        %v2320 = vpop.f32.mrf.mxu0
        %v2321 = vadd.f32 %v2222, %v2320
        %v2322 = vpop.f32.mrf.mxu0
        %2323 = vmatprep.mubr.f32.mxu0 0.0
        %v2324 = vand.u32 %v1246, 4294901760
        %2325 = vmatmul.mubr.f32.gmra.mxu0 %v2324
        %v2326 = vpop.f32.mrf.mxu0
        %v2327 = vadd.f32 %v2230, %v2326
        %v2328 = vpop.f32.mrf.mxu0
        %2329 = vmatprep.mubr.f32.mxu0 0.0
        %v2330 = vand.u32 %v1249, 4294901760
        %2331 = vmatmul.mubr.f32.gmra.mxu0 %v2330
        %v2332 = vpop.f32.mrf.mxu0
        %v2333 = vadd.f32 %v2238, %v2332
        %v2334 = vpop.f32.mrf.mxu0
        %2335 = vdwg.mxu0
        %2336 = vmatprep.subr.mxu0 0.0
        %2337 = vmatpush1.msra.mxu0 0.0
        %2338 = vmatprep.subr.mxu0 0.0
        %2339 = vmatpush1.msra.mxu0 0.0
        %2340 = vmatprep.subr.mxu0 0.0
        %2341 = vmatpush1.msra.mxu0 0.0
        %2342 = vmatprep.subr.mxu0 0.0
        %2343 = vmatpush1.msra.mxu0 0.0
        %2344 = vmatprep.subr.mxu0 0.0
        %2345 = vmatpush1.msra.mxu0 0.0
        %2346 = vmatprep.subr.mxu0 0.0
        %2347 = vmatpush1.msra.mxu0 0.0
        %2348 = vmatprep.subr.mxu0 0.0
        %2349 = vmatpush1.msra.mxu0 0.0
        %2350 = vmatprep.subr.mxu0 0.0
        %2351 = vmatpush1.msra.mxu0 0.0
        %2352 = vmatprep.subr.mxu0 0.0
        %2353 = vmatpush1.msra.mxu0 0.0
        %2354 = vmatprep.subr.mxu0 0.0
        %2355 = vmatpush1.msra.mxu0 0.0
        %2356 = vmatprep.subr.mxu0 0.0
        %2357 = vmatpush1.msra.mxu0 0.0
        %2358 = vmatprep.subr.mxu0 0.0
        %2359 = vmatpush1.msra.mxu0 0.0
        %2360 = vmatprep.subr.mxu0 0.0
        %2361 = vmatpush1.msra.mxu0 0.0
        %2362 = vmatprep.subr.mxu0 0.0
        %2363 = vmatpush1.msra.mxu0 0.0
        %2364 = vmatprep.subr.mxu0 0.0
        %v2365 = vand.u32 %v1236, 4294901760
        %2366 = vmatpush1.msra.mxu0 %v2365
        %2367 = vmatprep.subr.mxu0 0.0
        %v2368 = vand.u32 %v1230, 4294901760
        %2369 = vmatpush1.msra.mxu0 %v2368
        %2370 = vmatprep.subr.mxu0 0.0
        %2371 = vmatpush2.msra.mxu0 0.0
        %2372 = vmatprep.subr.mxu0 0.0
        %2373 = vmatpush2.msra.mxu0 0.0
        %2374 = vmatprep.subr.mxu0 0.0
        %2375 = vmatpush2.msra.mxu0 0.0
        %2376 = vmatprep.subr.mxu0 0.0
        %2377 = vmatpush2.msra.mxu0 0.0
        %2378 = vmatprep.subr.mxu0 0.0
        %2379 = vmatpush2.msra.mxu0 0.0
        %2380 = vmatprep.subr.mxu0 0.0
        %2381 = vmatpush2.msra.mxu0 0.0
        %2382 = vmatprep.subr.mxu0 0.0
        %2383 = vmatpush2.msra.mxu0 0.0
        %2384 = vmatprep.subr.mxu0 0.0
        %2385 = vmatpush2.msra.mxu0 0.0
        %2386 = vmatprep.subr.mxu0 0.0
        %2387 = vmatpush2.msra.mxu0 0.0
        %2388 = vmatprep.subr.mxu0 0.0
        %2389 = vmatpush2.msra.mxu0 0.0
        %2390 = vmatprep.subr.mxu0 0.0
        %2391 = vmatpush2.msra.mxu0 0.0
        %2392 = vmatprep.subr.mxu0 0.0
        %2393 = vmatpush2.msra.mxu0 0.0
        %2394 = vmatprep.subr.mxu0 0.0
        %2395 = vmatpush2.msra.mxu0 0.0
        %2396 = vmatprep.subr.mxu0 0.0
        %2397 = vmatpush2.msra.mxu0 0.0
        %2398 = vmatprep.subr.mxu0 0.0
        %2399 = vmatpush2.msra.mxu0 0.0
        %2400 = vmatprep.subr.mxu0 0.0
        %2401 = vmatpush2.msra.mxu0 0.0
        %2402 = vmatprep.mubr.f32.mxu0 0.0
        %v2403 = vand.u32 %v1240, 4294901760
        %2404 = vmatmul.mubr.f32.gmra.mxu0 %v2403
        %v2405 = vpop.f32.mrf.mxu0
        %v2406 = vadd.f32 %v2315, %v2405
        %v2407 = vpop.f32.mrf.mxu0
        %2408 = vmatprep.mubr.f32.mxu0 0.0
        %v2409 = vand.u32 %v1243, 4294901760
        %2410 = vmatmul.mubr.f32.gmra.mxu0 %v2409
        %v2411 = vpop.f32.mrf.mxu0
        %v2412 = vadd.f32 %v2321, %v2411
        %v2413 = vpop.f32.mrf.mxu0
        %2414 = vmatprep.mubr.f32.mxu0 0.0
        %v2415 = vand.u32 %v1246, 4294901760
        %2416 = vmatmul.mubr.f32.gmra.mxu0 %v2415
        %v2417 = vpop.f32.mrf.mxu0
        %v2418 = vadd.f32 %v2327, %v2417
        %v2419 = vpop.f32.mrf.mxu0
        %2420 = vmatprep.mubr.f32.mxu0 0.0
        %v2421 = vand.u32 %v1249, 4294901760
        %2422 = vmatmul.mubr.f32.gmra.mxu0 %v2421
        %v2423 = vpop.f32.mrf.mxu0
        %v2424 = vadd.f32 %v2333, %v2423
        %v2425 = vpop.f32.mrf.mxu0
        %2426 = vdwg.mxu0
        %vm2427 = vcmask 261120
        %2428 = vst.msk [vmem:[%s207] sm:$0xff] %vm2427, %v1818
        %2429 = vst.msk [vmem:[%s207 + $0x8] sm:$0xff] %vm2427, %v1824
        %2430 = vst.msk [vmem:[%s207 + $0x10] sm:$0xff] %vm2427, %v1830
        %2431 = vst.msk [vmem:[%s207 + $0x18] sm:$0xff] %vm2427, %v1836
        %2432 = vst.msk [vmem:[%s207 + $0x20] sm:$0xff] %vm2427, %v2406
        %2433 = vst.msk [vmem:[%s207 + $0x28] sm:$0xff] %vm2427, %v2412
        %2434 = vst.msk [vmem:[%s207 + $0x30] sm:$0xff] %vm2427, %v2418
        %2435 = vst.msk [vmem:[%s207 + $0x38] sm:$0xff] %vm2427, %v2424
        %s2436 = sand.u32 %s112, 1
        %s2437 = scalar_lea.sflag [#allocation4], %s2436
        %s2438 = sand.u32 %s112, 1
        %s2439 = smul.addr %s2438, 64
        %s2440 = scalar_lea.vmem [#allocation5], %s2439
        // Predicated region
        $region37: #{tpu_custom_call.1} parent=31 // pred_check
          %p2441 = pneg %p122
        $region38: #{tpu_custom_call.1} parent=31 // pred_check_branch
          %2443 = sbr.rel (%p2441) target = $region40
        $region39: #{tpu_custom_call.1} parent=31 // pred_region
          %s2444 = smul.u32 2, %s24
          %s2445 = smul.u32 4, %s25
          %s2447 = ssub.s32 1024, 1024
          %2448 = vsyncadd %s2437, %s2447
          %s2449 = smul.addr %s2444, 4
          %s2450 = sadd.s32 %s2445, %s2449
          %s2451 = smul.addr %s2450, 128
          %s2452 = scalar_lea.hbm %s3, %s2451
          %s2453 = sshll.u32 %s2440, 4
          %s2454 = int_to_ptr.vmem [resolvable:$true] %s2453
          %2459 = dma.vmem_to_hbm [thread:$0]  %s2454, 1024, %s2452, %s2437, 128, 128, 8
        $region40: #{tpu_custom_call.1} parent=31 // pred_fallthru
          _
      $region32: #{tpu_custom_call.1} parent=5 // pred_fallthru
        _
      %p2460 = scmp.le.s32.totalorder 2, %s15
      // Predicated region
      $region41: #{tpu_custom_call.1} parent=5 // pred_check
        %p2461 = pneg %p2460
      $region42: #{tpu_custom_call.1} parent=5 // pred_check_branch
        %2463 = sbr.rel (%p2461) target = $region44
      $region43: #{tpu_custom_call.1} parent=5 // pred_region
        %s2464 = ssub.s32 %s15, 2
        // Predicated region
        $region45: #{tpu_custom_call.1} parent=43 // pred_check
          %p2465 = pneg %p128
        $region46: #{tpu_custom_call.1} parent=43 // pred_check_branch
          %2467 = sbr.rel (%p2465) target = $region48
        $region47: #{tpu_custom_call.1} parent=43 // pred_region
          %s2468 = sand.u32 %s113, 1
          %s2469 = scalar_lea.sflag [#allocation4], %s2468
          %s2470 = sand.u32 %s113, 1
          %s2471 = smul.addr %s2470, 64
          %s2472 = scalar_lea.vmem [#allocation5], %s2471
          %2473 = dma.done %s2469, 1024
        $region48: #{tpu_custom_call.1} parent=43 // pred_fallthru
          _
      $region44: #{tpu_custom_call.1} parent=5 // pred_fallthru
        _
    $region6: #{tpu_custom_call.1} parent=1 // loop_footer
      %s19 = sadd.s32 1, %s15
    $region7: #{tpu_custom_call.1} parent=1 // loop_footer_branch
      %14 = sbr.rel target = $region3
    $region8: #{tpu_custom_call.1} parent=1 // loop_exit
      _
    %2474 = vsyncpa [#allocation3], 1
    %s2475 = scalar_lea.sflag [#allocation3], 1
    %2476 = vsyncpa %s2475, 1
    %2477 = vsyncpa [#allocation4], 1
    %s2478 = scalar_lea.sflag [#allocation4], 1
    %2479 = vsyncpa %s2478, 1

</llo_original>
